<compile_context>
chip_gen: v6e
topology: v6e:2x2x1
jax: 0.10.0
libtpu: 0.0.40
codegen_flags: <defaults>
</compile_context>

<pallas_src>
import functools

import jax
import jax.numpy as jnp
from jax.experimental import pallas as pl
from jax.experimental.pallas import tpu as pltpu

EPS = 1e-5
CP = 8  # channel rows padded to one sublane tile (8) so im2col stacking stays 8-aligned


def _round_up(x, m):
    return (x + m - 1) // m * m


def _basic_block_kernel(x_ref, w1_ref, g1_ref, be1_ref, w2_ref, g2_ref, be2_ref,
                        wd_ref, bd_ref, o_ref, patch_ref, *, N, H, W, Hp, Wp, Mp):
    M = N * Hp * Wp                   # valid extent of the flat padded spatial axis
    inv_n = 1.0 / float(N * H * W)    # BN statistics are over the N*H*W interior pixels

    # ---- interior masks, generated in-kernel from a lane iota (no HBM mask input).
    #      float mul/floor/compare only; the 0.5/Wp margin makes the floor-divisions exact.
    pf = jax.lax.broadcasted_iota(jnp.int32, (1, Mp), 1).astype(jnp.float32)
    row = jnp.floor((pf + 0.5) * (1.0 / Wp))                 # p // Wp
    wg = pf - row * Wp                                       # p %  Wp
    hg = row - jnp.floor((row + 0.5) * (1.0 / Hp)) * Hp      # (p // Wp) % Hp
    valid = pf < float(M)
    # conv1-output grid position (hg, wg) holds output pixel (hg-1, wg-1)
    mask1 = valid & (hg >= 1.0) & (hg <= float(H)) & (wg >= 1.0) & (wg <= float(W))
    # conv2 / final-output grid position (hg, wg) holds output pixel (hg, wg)
    mask2 = valid & (hg < float(H)) & (wg < float(W))

    x = x_ref[...]                    # (8, Mp): channels-major, flat spatial on lanes

    def im2col(a):
        # 9 taps = 9 lane rotations of the flat spatial axis (XLU), stacked at 8-aligned
        # sublane offsets in VMEM scratch -> one MXU dot per conv.
        for t in range(9):
            d = (t // 3) * Wp + (t % 3)
            patch_ref[pl.ds(t * CP, CP), :] = a if d == 0 else pltpu.roll(a, Mp - d, axis=1)
        return patch_ref[...]

    def batch_stats(acc, mask_f):
        a = acc * mask_f
        s = jnp.sum(a, axis=1, keepdims=True)
        ss = jnp.sum(a * acc, axis=1, keepdims=True)
        mean = s * inv_n
        var = jnp.maximum(ss * inv_n - mean * mean, 0.0)     # single-pass; fine in f32 here
        return mean, var

    # ---- conv1 (bias absorbed by training-mode BN) + bn1 + relu (mask merged into one select)
    acc1 = jnp.dot(w1_ref[...], im2col(x), preferred_element_type=jnp.float32)    # (8, Mp)
    mean1, var1 = batch_stats(acc1, mask1.astype(jnp.float32))
    y1 = (acc1 - mean1) * jax.lax.rsqrt(var1 + EPS) * g1_ref[...] + be1_ref[...]
    y = jnp.where(mask1, jnp.maximum(y1, 0.0), 0.0)          # zero ring == conv2's padding=1

    # ---- conv2 + bn2
    acc2 = jnp.dot(w2_ref[...], im2col(y), preferred_element_type=jnp.float32)    # (8, Mp)
    mean2, var2 = batch_stats(acc2, mask2.astype(jnp.float32))
    z = (acc2 - mean2) * jax.lax.rsqrt(var2 + EPS) * g2_ref[...] + be2_ref[...]

    # ---- 1x1 downsample identity on the same flat grid (+2,+2 shift selects the real pixels)
    x_id = pltpu.roll(x, Mp - (2 * Wp + 2), axis=1)
    iden = jnp.dot(wd_ref[...], x_id, preferred_element_type=jnp.float32) + bd_ref[...]

    # ---- residual add + relu; lane-dense (8, Mp) store, interior extracted in the wrapper
    o_ref[...] = jnp.maximum(z + iden, 0.0)


def basic_block_pallas(x_nhwc, p):
    N, H, W, Cin = x_nhwc.shape
    Cout = p["w1"].shape[-1]
    assert Cin <= CP and Cout <= CP, "this script packs channels into one 8-row sublane tile"
    Hp, Wp = H + 4, W + 4             # pad-by-2 grid (also holds conv1's 1-padded output grid)
    M = N * Hp * Wp
    Mp = _round_up(M, 128)            # lane axis multiple of 128 -> dense vregs, aligned stores

    # channels-major, flat-spatial, lane-dense activation layout: (8, Mp)
    xc = jnp.transpose(x_nhwc, (3, 0, 1, 2))                        # (Cin, N, H, W)
    xc = jnp.pad(xc, ((0, CP - Cin), (0, 0), (2, 2), (2, 2)))        # (8, N, Hp, Wp)
    xflat = jnp.pad(xc.reshape(CP, M), ((0, 0), (0, Mp - M)))        # (8, Mp)

    # weights / BN params pre-packed for exactly the dots the kernel performs
    w1p = jnp.pad(p["w1"], ((0, 0), (0, 0), (0, CP - Cin), (0, CP - Cout)))
    W1 = w1p.reshape(9 * CP, CP).T                                   # (8, 72): [co, tap*8 + ci]
    w2p = jnp.pad(p["w2"], ((0, 0), (0, 0), (0, CP - Cout), (0, CP - Cout)))
    W2 = w2p.reshape(9 * CP, CP).T                                   # (8, 72)
    Wd = jnp.pad(p["wd"], ((0, CP - Cin), (0, CP - Cout))).T         # (8, 8)

    def col(v):   # per-channel vector -> (8, 1) column (broadcasts over the lane axis)
        return jnp.pad(v.reshape(-1, 1), ((0, CP - Cout), (0, 0)))

    in_arrays = [xflat, W1, col(p["g1"]), col(p["be1"]),
                 W2, col(p["g2"]), col(p["be2"]),
                 Wd, col(p["bd"])]

    kernel = functools.partial(_basic_block_kernel, N=N, H=H, W=W, Hp=Hp, Wp=Wp, Mp=Mp)

    def full_spec(shape):
        return pl.BlockSpec(shape, lambda i, s=shape: (0,) * len(s))

    out = pl.pallas_call(
        kernel,
        out_shape=jax.ShapeDtypeStruct((CP, Mp), jnp.float32),
        grid_spec=pltpu.PrefetchScalarGridSpec(
            num_scalar_prefetch=0,
            grid=(1,),
            in_specs=[full_spec(a.shape) for a in in_arrays],
            out_specs=full_spec((CP, Mp)),
            scratch_shapes=[pltpu.VMEM((9 * CP, Mp), jnp.float32)],   # shared im2col buffer
        ),
        compiler_params=pltpu.CompilerParams(dimension_semantics=("arbitrary",)),
    )(*in_arrays)

    out = out[:Cout, :M].reshape(Cout, N, Hp, Wp)[:, :, :H, :W]
    return jnp.transpose(out, (1, 2, 3, 0))                          # NHWC


def basic_block_reference(x_nhwc, p):
    dn = ("NHWC", "HWIO", "NHWC")

    def bn(y, g, b):
        m = y.mean((0, 1, 2))
        v = ((y - m) ** 2).mean((0, 1, 2))
        return (y - m) * jax.lax.rsqrt(v + EPS) * g.reshape(1, 1, 1, -1) + b.reshape(1, 1, 1, -1)

    y = jax.lax.conv_general_dilated(x_nhwc, p["w1"], (1, 1), "SAME",
                                     dimension_numbers=dn) + p["b1"].reshape(1, 1, 1, -1)
    y = jnp.maximum(bn(y, p["g1"], p["be1"]), 0.0)
    z = jax.lax.conv_general_dilated(y, p["w2"], (1, 1), "SAME",
                                     dimension_numbers=dn) + p["b2"].reshape(1, 1, 1, -1)
    z = bn(z, p["g2"], p["be2"])
    iden = jnp.einsum("nhwi,io->nhwo", x_nhwc, p["wd"]) + p["bd"].reshape(1, 1, 1, -1)
    return jnp.maximum(z + iden, 0.0)


if __name__ == "__main__":
    # BasicBlock(inplanes=4, planes=8, stride=1)  ->  downsample = 1x1 conv (4 -> 8)
    N, Cin, H, W = 2, 4, 16, 16
    Cout = 8

    key = jax.random.PRNGKey(0)
    ks = jax.random.split(key, 11)
    params = {
        "w1": 0.1 * jax.random.normal(ks[0], (3, 3, Cin, Cout), jnp.float32),
        "b1": 0.1 * jax.random.normal(ks[1], (1, Cout), jnp.float32),   # reference only (BN absorbs it)
        "g1": 1.0 + 0.1 * jax.random.normal(ks[2], (1, Cout), jnp.float32),
        "be1": 0.1 * jax.random.normal(ks[3], (1, Cout), jnp.float32),
        "w2": 0.1 * jax.random.normal(ks[4], (3, 3, Cout, Cout), jnp.float32),
        "b2": 0.1 * jax.random.normal(ks[5], (1, Cout), jnp.float32),   # reference only (BN absorbs it)
        "g2": 1.0 + 0.1 * jax.random.normal(ks[6], (1, Cout), jnp.float32),
        "be2": 0.1 * jax.random.normal(ks[7], (1, Cout), jnp.float32),
        "wd": 0.1 * jax.random.normal(ks[8], (Cin, Cout), jnp.float32),
        "bd": 0.1 * jax.random.normal(ks[9], (1, Cout), jnp.float32),
    }

    x_nchw = jax.random.normal(ks[10], (N, Cin, H, W), jnp.float32)   # PyTorch NCHW input
    x_nhwc = jnp.transpose(x_nchw, (0, 2, 3, 1))

    out = jax.block_until_ready(basic_block_pallas(x_nhwc, params))
    ref = jax.block_until_ready(basic_block_reference(x_nhwc, params))

    assert out.shape == (N, H, W, Cout)
    assert jnp.allclose(out, ref, atol=1e-3, rtol=1e-3), float(jnp.max(jnp.abs(out - ref)))
    print("KERNEL_OK")
</pallas_src>

<mosaic_0001>
module attributes {stable_mosaic.version = 11 : i64} {
  func.func @_basic_block_kernel(%arg0: i32, %arg1: memref<8x896xf32, #tpu.memory_space<vmem>>, %arg2: memref<8x72xf32, #tpu.memory_space<vmem>>, %arg3: memref<8x1xf32, #tpu.memory_space<vmem>>, %arg4: memref<8x1xf32, #tpu.memory_space<vmem>>, %arg5: memref<8x72xf32, #tpu.memory_space<vmem>>, %arg6: memref<8x1xf32, #tpu.memory_space<vmem>>, %arg7: memref<8x1xf32, #tpu.memory_space<vmem>>, %arg8: memref<8x8xf32, #tpu.memory_space<vmem>>, %arg9: memref<8x1xf32, #tpu.memory_space<vmem>>, %arg10: memref<8x896xf32, #tpu.memory_space<vmem>>, %arg11: memref<72x896xf32, #tpu.memory_space<vmem>>) attributes {dimension_semantics = [#tpu.dimension_semantics<arbitrary>], iteration_bounds = array<i64: 1>, scalar_prefetch = 0 : i64, scratch_operands = 1 : i64, tpu.core_type = #tpu.core_type<tc>, window_params = [{pipeline_mode = #tpu.pipeline_mode<synchronous>, transform_indices = @transform_0, window_bounds = array<i64: 8, 896>}, {pipeline_mode = #tpu.pipeline_mode<synchronous>, transform_indices = @transform_1, window_bounds = array<i64: 8, 72>}, {pipeline_mode = #tpu.pipeline_mode<synchronous>, transform_indices = @transform_2, window_bounds = array<i64: 8, 1>}, {pipeline_mode = #tpu.pipeline_mode<synchronous>, transform_indices = @transform_3, window_bounds = array<i64: 8, 1>}, {pipeline_mode = #tpu.pipeline_mode<synchronous>, transform_indices = @transform_4, window_bounds = array<i64: 8, 72>}, {pipeline_mode = #tpu.pipeline_mode<synchronous>, transform_indices = @transform_5, window_bounds = array<i64: 8, 1>}, {pipeline_mode = #tpu.pipeline_mode<synchronous>, transform_indices = @transform_6, window_bounds = array<i64: 8, 1>}, {pipeline_mode = #tpu.pipeline_mode<synchronous>, transform_indices = @transform_7, window_bounds = array<i64: 8, 8>}, {pipeline_mode = #tpu.pipeline_mode<synchronous>, transform_indices = @transform_8, window_bounds = array<i64: 8, 1>}, {pipeline_mode = #tpu.pipeline_mode<synchronous>, transform_indices = @transform_9, window_bounds = array<i64: 8, 896>}]} {
    %0 = tpu.iota {dimensions = array<i32: 1>} : vector<1x896xi32>
    %1 = arith.sitofp %0 : vector<1x896xi32> to vector<1x896xf32>
    %cst = arith.constant 5.000000e-01 : f32
    %2 = vector.broadcast %cst : f32 to vector<1x896xf32>
    %3 = arith.addf %1, %2 : vector<1x896xf32>
    %cst_0 = arith.constant 5.000000e-02 : f32
    %4 = vector.broadcast %cst_0 : f32 to vector<1x896xf32>
    %5 = arith.mulf %3, %4 : vector<1x896xf32>
    %6 = math.floor %5 : vector<1x896xf32>
    %cst_1 = arith.constant 2.000000e+01 : f32
    %7 = vector.broadcast %cst_1 : f32 to vector<1x896xf32>
    %8 = arith.mulf %6, %7 : vector<1x896xf32>
    %9 = arith.subf %1, %8 : vector<1x896xf32>
    %cst_2 = arith.constant 5.000000e-01 : f32
    %10 = vector.broadcast %cst_2 : f32 to vector<1x896xf32>
    %11 = arith.addf %6, %10 : vector<1x896xf32>
    %cst_3 = arith.constant 5.000000e-02 : f32
    %12 = vector.broadcast %cst_3 : f32 to vector<1x896xf32>
    %13 = arith.mulf %11, %12 : vector<1x896xf32>
    %14 = math.floor %13 : vector<1x896xf32>
    %cst_4 = arith.constant 2.000000e+01 : f32
    %15 = vector.broadcast %cst_4 : f32 to vector<1x896xf32>
    %16 = arith.mulf %14, %15 : vector<1x896xf32>
    %17 = arith.subf %6, %16 : vector<1x896xf32>
    %cst_5 = arith.constant 8.000000e+02 : f32
    %18 = vector.broadcast %cst_5 : f32 to vector<1x896xf32>
    %19 = arith.cmpf olt, %1, %18 : vector<1x896xf32>
    %cst_6 = arith.constant 1.000000e+00 : f32
    %20 = vector.broadcast %cst_6 : f32 to vector<1x896xf32>
    %21 = arith.cmpf oge, %17, %20 : vector<1x896xf32>
    %22 = arith.andi %19, %21 : vector<1x896xi1>
    %cst_7 = arith.constant 1.600000e+01 : f32
    %23 = vector.broadcast %cst_7 : f32 to vector<1x896xf32>
    %24 = arith.cmpf ole, %17, %23 : vector<1x896xf32>
    %25 = arith.andi %22, %24 : vector<1x896xi1>
    %cst_8 = arith.constant 1.000000e+00 : f32
    %26 = vector.broadcast %cst_8 : f32 to vector<1x896xf32>
    %27 = arith.cmpf oge, %9, %26 : vector<1x896xf32>
    %28 = arith.andi %25, %27 : vector<1x896xi1>
    %cst_9 = arith.constant 1.600000e+01 : f32
    %29 = vector.broadcast %cst_9 : f32 to vector<1x896xf32>
    %30 = arith.cmpf ole, %9, %29 : vector<1x896xf32>
    %31 = arith.andi %28, %30 : vector<1x896xi1>
    %cst_10 = arith.constant 1.600000e+01 : f32
    %32 = vector.broadcast %cst_10 : f32 to vector<1x896xf32>
    %33 = arith.cmpf olt, %17, %32 : vector<1x896xf32>
    %34 = arith.andi %19, %33 : vector<1x896xi1>
    %cst_11 = arith.constant 1.600000e+01 : f32
    %35 = vector.broadcast %cst_11 : f32 to vector<1x896xf32>
    %36 = arith.cmpf olt, %9, %35 : vector<1x896xf32>
    %37 = arith.andi %34, %36 : vector<1x896xi1>
    %c0 = arith.constant 0 : index
    %c0_12 = arith.constant 0 : index
    %38 = vector.load %arg1[%c0, %c0_12] : memref<8x896xf32, #tpu.memory_space<vmem>>, vector<8x896xf32>
    %c0_13 = arith.constant 0 : index
    %c0_14 = arith.constant 0 : index
    %39 = vector.load %arg2[%c0_13, %c0_14] : memref<8x72xf32, #tpu.memory_space<vmem>>, vector<8x72xf32>
    %c0_15 = arith.constant 0 : index
    %c0_16 = arith.constant 0 : index
    %40 = vector.load %arg11[%c0_15, %c0_16] : memref<72x896xf32, #tpu.memory_space<vmem>>, vector<8x896xf32>
    tpu.vector_store %arg11[%c0_15, %c0_16], %38 {strides = array<i32>} : memref<72x896xf32, #tpu.memory_space<vmem>>, vector<8x896xf32>,
    %c895_i32 = arith.constant 895 : i32
    %41 = tpu.dynamic_rotate %38 by %c895_i32 dim 1 : vector<8x896xf32>, i32 -> vector<8x896xf32>
    %c8 = arith.constant 8 : index
    %c0_17 = arith.constant 0 : index
    %42 = vector.load %arg11[%c8, %c0_17] : memref<72x896xf32, #tpu.memory_space<vmem>>, vector<8x896xf32>
    tpu.vector_store %arg11[%c8, %c0_17], %41 {strides = array<i32>} : memref<72x896xf32, #tpu.memory_space<vmem>>, vector<8x896xf32>,
    %c894_i32 = arith.constant 894 : i32
    %43 = tpu.dynamic_rotate %38 by %c894_i32 dim 1 : vector<8x896xf32>, i32 -> vector<8x896xf32>
    %c16 = arith.constant 16 : index
    %c0_18 = arith.constant 0 : index
    %44 = vector.load %arg11[%c16, %c0_18] : memref<72x896xf32, #tpu.memory_space<vmem>>, vector<8x896xf32>
    tpu.vector_store %arg11[%c16, %c0_18], %43 {strides = array<i32>} : memref<72x896xf32, #tpu.memory_space<vmem>>, vector<8x896xf32>,
    %c876_i32 = arith.constant 876 : i32
    %45 = tpu.dynamic_rotate %38 by %c876_i32 dim 1 : vector<8x896xf32>, i32 -> vector<8x896xf32>
    %c24 = arith.constant 24 : index
    %c0_19 = arith.constant 0 : index
    %46 = vector.load %arg11[%c24, %c0_19] : memref<72x896xf32, #tpu.memory_space<vmem>>, vector<8x896xf32>
    tpu.vector_store %arg11[%c24, %c0_19], %45 {strides = array<i32>} : memref<72x896xf32, #tpu.memory_space<vmem>>, vector<8x896xf32>,
    %c875_i32 = arith.constant 875 : i32
    %47 = tpu.dynamic_rotate %38 by %c875_i32 dim 1 : vector<8x896xf32>, i32 -> vector<8x896xf32>
    %c32 = arith.constant 32 : index
    %c0_20 = arith.constant 0 : index
    %48 = vector.load %arg11[%c32, %c0_20] : memref<72x896xf32, #tpu.memory_space<vmem>>, vector<8x896xf32>
    tpu.vector_store %arg11[%c32, %c0_20], %47 {strides = array<i32>} : memref<72x896xf32, #tpu.memory_space<vmem>>, vector<8x896xf32>,
    %c874_i32 = arith.constant 874 : i32
    %49 = tpu.dynamic_rotate %38 by %c874_i32 dim 1 : vector<8x896xf32>, i32 -> vector<8x896xf32>
    %c40 = arith.constant 40 : index
    %c0_21 = arith.constant 0 : index
    %50 = vector.load %arg11[%c40, %c0_21] : memref<72x896xf32, #tpu.memory_space<vmem>>, vector<8x896xf32>
    tpu.vector_store %arg11[%c40, %c0_21], %49 {strides = array<i32>} : memref<72x896xf32, #tpu.memory_space<vmem>>, vector<8x896xf32>,
    %c856_i32 = arith.constant 856 : i32
    %51 = tpu.dynamic_rotate %38 by %c856_i32 dim 1 : vector<8x896xf32>, i32 -> vector<8x896xf32>
    %c48 = arith.constant 48 : index
    %c0_22 = arith.constant 0 : index
    %52 = vector.load %arg11[%c48, %c0_22] : memref<72x896xf32, #tpu.memory_space<vmem>>, vector<8x896xf32>
    tpu.vector_store %arg11[%c48, %c0_22], %51 {strides = array<i32>} : memref<72x896xf32, #tpu.memory_space<vmem>>, vector<8x896xf32>,
    %c855_i32 = arith.constant 855 : i32
    %53 = tpu.dynamic_rotate %38 by %c855_i32 dim 1 : vector<8x896xf32>, i32 -> vector<8x896xf32>
    %c56 = arith.constant 56 : index
    %c0_23 = arith.constant 0 : index
    %54 = vector.load %arg11[%c56, %c0_23] : memref<72x896xf32, #tpu.memory_space<vmem>>, vector<8x896xf32>
    tpu.vector_store %arg11[%c56, %c0_23], %53 {strides = array<i32>} : memref<72x896xf32, #tpu.memory_space<vmem>>, vector<8x896xf32>,
    %c854_i32 = arith.constant 854 : i32
    %55 = tpu.dynamic_rotate %38 by %c854_i32 dim 1 : vector<8x896xf32>, i32 -> vector<8x896xf32>
    %c64 = arith.constant 64 : index
    %c0_24 = arith.constant 0 : index
    %56 = vector.load %arg11[%c64, %c0_24] : memref<72x896xf32, #tpu.memory_space<vmem>>, vector<8x896xf32>
    tpu.vector_store %arg11[%c64, %c0_24], %55 {strides = array<i32>} : memref<72x896xf32, #tpu.memory_space<vmem>>, vector<8x896xf32>,
    %c0_25 = arith.constant 0 : index
    %c0_26 = arith.constant 0 : index
    %57 = vector.load %arg11[%c0_25, %c0_26] : memref<72x896xf32, #tpu.memory_space<vmem>>, vector<72x896xf32>
    %cst_27 = arith.constant dense<0.000000e+00> : vector<8x896xf32>
    %58 = tpu.matmul %39, %57, %cst_27 {dimension_numbers = #tpu.dot_dimension_numbers<[1], [0], [0], [1], [0, 0, 1, 1], [], []>} : vector<8x72xf32>, vector<72x896xf32>, vector<8x896xf32> -> vector<8x896xf32>
    %59 = arith.extui %31 : vector<1x896xi1> to vector<1x896xi32>
    %60 = arith.sitofp %59 : vector<1x896xi32> to vector<1x896xf32>
    %61 = vector.broadcast %60 : vector<1x896xf32> to vector<8x896xf32>
    %62 = arith.mulf %58, %61 : vector<8x896xf32>
    %cst_28 = arith.constant dense<0.000000e+00> : vector<8xf32>
    %63 = vector.multi_reduction <add>, %62, %cst_28 [1] : vector<8x896xf32> to vector<8xf32>
    %64 = vector.shape_cast %63 : vector<8xf32> to vector<8x1xf32>
    %65 = arith.mulf %62, %58 : vector<8x896xf32>
    %cst_29 = arith.constant dense<0.000000e+00> : vector<8xf32>
    %66 = vector.multi_reduction <add>, %65, %cst_29 [1] : vector<8x896xf32> to vector<8xf32>
    %67 = vector.shape_cast %66 : vector<8xf32> to vector<8x1xf32>
    %cst_30 = arith.constant 0.001953125 : f32
    %68 = vector.broadcast %cst_30 : f32 to vector<8x1xf32>
    %69 = arith.mulf %64, %68 : vector<8x1xf32>
    %cst_31 = arith.constant 0.001953125 : f32
    %70 = vector.broadcast %cst_31 : f32 to vector<8x1xf32>
    %71 = arith.mulf %67, %70 : vector<8x1xf32>
    %72 = arith.mulf %69, %69 : vector<8x1xf32>
    %73 = arith.subf %71, %72 : vector<8x1xf32>
    %cst_32 = arith.constant 0.000000e+00 : f32
    %74 = vector.broadcast %cst_32 : f32 to vector<8x1xf32>
    %75 = arith.maximumf %73, %74 : vector<8x1xf32>
    %76 = vector.broadcast %69 : vector<8x1xf32> to vector<8x896xf32>
    %77 = arith.subf %58, %76 : vector<8x896xf32>
    %cst_33 = arith.constant 9.99999974E-6 : f32
    %78 = vector.broadcast %cst_33 : f32 to vector<8x1xf32>
    %79 = arith.addf %75, %78 : vector<8x1xf32>
    %80 = math.rsqrt %79 : vector<8x1xf32>
    %81 = vector.broadcast %80 : vector<8x1xf32> to vector<8x896xf32>
    %82 = arith.mulf %77, %81 : vector<8x896xf32>
    %c0_34 = arith.constant 0 : index
    %c0_35 = arith.constant 0 : index
    %83 = vector.load %arg3[%c0_34, %c0_35] : memref<8x1xf32, #tpu.memory_space<vmem>>, vector<8x1xf32>
    %84 = vector.broadcast %83 : vector<8x1xf32> to vector<8x896xf32>
    %85 = arith.mulf %82, %84 : vector<8x896xf32>
    %c0_36 = arith.constant 0 : index
    %c0_37 = arith.constant 0 : index
    %86 = vector.load %arg4[%c0_36, %c0_37] : memref<8x1xf32, #tpu.memory_space<vmem>>, vector<8x1xf32>
    %87 = vector.broadcast %86 : vector<8x1xf32> to vector<8x896xf32>
    %88 = arith.addf %85, %87 : vector<8x896xf32>
    %cst_38 = arith.constant 0.000000e+00 : f32
    %89 = vector.broadcast %cst_38 : f32 to vector<8x896xf32>
    %90 = arith.maximumf %88, %89 : vector<8x896xf32>
    %cst_39 = arith.constant 0.000000e+00 : f32
    %91 = vector.shape_cast %31 : vector<1x896xi1> to vector<1x896xi1>
    %92 = vector.broadcast %91 : vector<1x896xi1> to vector<8x896xi1>
    %93 = vector.broadcast %cst_39 : f32 to vector<8x896xf32>
    %94 = arith.select %92, %90, %93 : vector<8x896xi1>, vector<8x896xf32>
    %c0_40 = arith.constant 0 : index
    %c0_41 = arith.constant 0 : index
    %95 = vector.load %arg5[%c0_40, %c0_41] : memref<8x72xf32, #tpu.memory_space<vmem>>, vector<8x72xf32>
    %c0_42 = arith.constant 0 : index
    %c0_43 = arith.constant 0 : index
    %96 = vector.load %arg11[%c0_42, %c0_43] : memref<72x896xf32, #tpu.memory_space<vmem>>, vector<8x896xf32>
    tpu.vector_store %arg11[%c0_42, %c0_43], %94 {strides = array<i32>} : memref<72x896xf32, #tpu.memory_space<vmem>>, vector<8x896xf32>,
    %c895_i32_44 = arith.constant 895 : i32
    %97 = tpu.dynamic_rotate %94 by %c895_i32_44 dim 1 : vector<8x896xf32>, i32 -> vector<8x896xf32>
    %c8_45 = arith.constant 8 : index
    %c0_46 = arith.constant 0 : index
    %98 = vector.load %arg11[%c8_45, %c0_46] : memref<72x896xf32, #tpu.memory_space<vmem>>, vector<8x896xf32>
    tpu.vector_store %arg11[%c8_45, %c0_46], %97 {strides = array<i32>} : memref<72x896xf32, #tpu.memory_space<vmem>>, vector<8x896xf32>,
    %c894_i32_47 = arith.constant 894 : i32
    %99 = tpu.dynamic_rotate %94 by %c894_i32_47 dim 1 : vector<8x896xf32>, i32 -> vector<8x896xf32>
    %c16_48 = arith.constant 16 : index
    %c0_49 = arith.constant 0 : index
    %100 = vector.load %arg11[%c16_48, %c0_49] : memref<72x896xf32, #tpu.memory_space<vmem>>, vector<8x896xf32>
    tpu.vector_store %arg11[%c16_48, %c0_49], %99 {strides = array<i32>} : memref<72x896xf32, #tpu.memory_space<vmem>>, vector<8x896xf32>,
    %c876_i32_50 = arith.constant 876 : i32
    %101 = tpu.dynamic_rotate %94 by %c876_i32_50 dim 1 : vector<8x896xf32>, i32 -> vector<8x896xf32>
    %c24_51 = arith.constant 24 : index
    %c0_52 = arith.constant 0 : index
    %102 = vector.load %arg11[%c24_51, %c0_52] : memref<72x896xf32, #tpu.memory_space<vmem>>, vector<8x896xf32>
    tpu.vector_store %arg11[%c24_51, %c0_52], %101 {strides = array<i32>} : memref<72x896xf32, #tpu.memory_space<vmem>>, vector<8x896xf32>,
    %c875_i32_53 = arith.constant 875 : i32
    %103 = tpu.dynamic_rotate %94 by %c875_i32_53 dim 1 : vector<8x896xf32>, i32 -> vector<8x896xf32>
    %c32_54 = arith.constant 32 : index
    %c0_55 = arith.constant 0 : index
    %104 = vector.load %arg11[%c32_54, %c0_55] : memref<72x896xf32, #tpu.memory_space<vmem>>, vector<8x896xf32>
    tpu.vector_store %arg11[%c32_54, %c0_55], %103 {strides = array<i32>} : memref<72x896xf32, #tpu.memory_space<vmem>>, vector<8x896xf32>,
    %c874_i32_56 = arith.constant 874 : i32
    %105 = tpu.dynamic_rotate %94 by %c874_i32_56 dim 1 : vector<8x896xf32>, i32 -> vector<8x896xf32>
    %c40_57 = arith.constant 40 : index
    %c0_58 = arith.constant 0 : index
    %106 = vector.load %arg11[%c40_57, %c0_58] : memref<72x896xf32, #tpu.memory_space<vmem>>, vector<8x896xf32>
    tpu.vector_store %arg11[%c40_57, %c0_58], %105 {strides = array<i32>} : memref<72x896xf32, #tpu.memory_space<vmem>>, vector<8x896xf32>,
    %c856_i32_59 = arith.constant 856 : i32
    %107 = tpu.dynamic_rotate %94 by %c856_i32_59 dim 1 : vector<8x896xf32>, i32 -> vector<8x896xf32>
    %c48_60 = arith.constant 48 : index
    %c0_61 = arith.constant 0 : index
    %108 = vector.load %arg11[%c48_60, %c0_61] : memref<72x896xf32, #tpu.memory_space<vmem>>, vector<8x896xf32>
    tpu.vector_store %arg11[%c48_60, %c0_61], %107 {strides = array<i32>} : memref<72x896xf32, #tpu.memory_space<vmem>>, vector<8x896xf32>,
    %c855_i32_62 = arith.constant 855 : i32
    %109 = tpu.dynamic_rotate %94 by %c855_i32_62 dim 1 : vector<8x896xf32>, i32 -> vector<8x896xf32>
    %c56_63 = arith.constant 56 : index
    %c0_64 = arith.constant 0 : index
    %110 = vector.load %arg11[%c56_63, %c0_64] : memref<72x896xf32, #tpu.memory_space<vmem>>, vector<8x896xf32>
    tpu.vector_store %arg11[%c56_63, %c0_64], %109 {strides = array<i32>} : memref<72x896xf32, #tpu.memory_space<vmem>>, vector<8x896xf32>,
    %c854_i32_65 = arith.constant 854 : i32
    %111 = tpu.dynamic_rotate %94 by %c854_i32_65 dim 1 : vector<8x896xf32>, i32 -> vector<8x896xf32>
    %c64_66 = arith.constant 64 : index
    %c0_67 = arith.constant 0 : index
    %112 = vector.load %arg11[%c64_66, %c0_67] : memref<72x896xf32, #tpu.memory_space<vmem>>, vector<8x896xf32>
    tpu.vector_store %arg11[%c64_66, %c0_67], %111 {strides = array<i32>} : memref<72x896xf32, #tpu.memory_space<vmem>>, vector<8x896xf32>,
    %c0_68 = arith.constant 0 : index
    %c0_69 = arith.constant 0 : index
    %113 = vector.load %arg11[%c0_68, %c0_69] : memref<72x896xf32, #tpu.memory_space<vmem>>, vector<72x896xf32>
    %cst_70 = arith.constant dense<0.000000e+00> : vector<8x896xf32>
    %114 = tpu.matmul %95, %113, %cst_70 {dimension_numbers = #tpu.dot_dimension_numbers<[1], [0], [0], [1], [0, 0, 1, 1], [], []>} : vector<8x72xf32>, vector<72x896xf32>, vector<8x896xf32> -> vector<8x896xf32>
    %115 = arith.extui %37 : vector<1x896xi1> to vector<1x896xi32>
    %116 = arith.sitofp %115 : vector<1x896xi32> to vector<1x896xf32>
    %117 = vector.broadcast %116 : vector<1x896xf32> to vector<8x896xf32>
    %118 = arith.mulf %114, %117 : vector<8x896xf32>
    %cst_71 = arith.constant dense<0.000000e+00> : vector<8xf32>
    %119 = vector.multi_reduction <add>, %118, %cst_71 [1] : vector<8x896xf32> to vector<8xf32>
    %120 = vector.shape_cast %119 : vector<8xf32> to vector<8x1xf32>
    %121 = arith.mulf %118, %114 : vector<8x896xf32>
    %cst_72 = arith.constant dense<0.000000e+00> : vector<8xf32>
    %122 = vector.multi_reduction <add>, %121, %cst_72 [1] : vector<8x896xf32> to vector<8xf32>
    %123 = vector.shape_cast %122 : vector<8xf32> to vector<8x1xf32>
    %cst_73 = arith.constant 0.001953125 : f32
    %124 = vector.broadcast %cst_73 : f32 to vector<8x1xf32>
    %125 = arith.mulf %120, %124 : vector<8x1xf32>
    %cst_74 = arith.constant 0.001953125 : f32
    %126 = vector.broadcast %cst_74 : f32 to vector<8x1xf32>
    %127 = arith.mulf %123, %126 : vector<8x1xf32>
    %128 = arith.mulf %125, %125 : vector<8x1xf32>
    %129 = arith.subf %127, %128 : vector<8x1xf32>
    %cst_75 = arith.constant 0.000000e+00 : f32
    %130 = vector.broadcast %cst_75 : f32 to vector<8x1xf32>
    %131 = arith.maximumf %129, %130 : vector<8x1xf32>
    %132 = vector.broadcast %125 : vector<8x1xf32> to vector<8x896xf32>
    %133 = arith.subf %114, %132 : vector<8x896xf32>
    %cst_76 = arith.constant 9.99999974E-6 : f32
    %134 = vector.broadcast %cst_76 : f32 to vector<8x1xf32>
    %135 = arith.addf %131, %134 : vector<8x1xf32>
    %136 = math.rsqrt %135 : vector<8x1xf32>
    %137 = vector.broadcast %136 : vector<8x1xf32> to vector<8x896xf32>
    %138 = arith.mulf %133, %137 : vector<8x896xf32>
    %c0_77 = arith.constant 0 : index
    %c0_78 = arith.constant 0 : index
    %139 = vector.load %arg6[%c0_77, %c0_78] : memref<8x1xf32, #tpu.memory_space<vmem>>, vector<8x1xf32>
    %140 = vector.broadcast %139 : vector<8x1xf32> to vector<8x896xf32>
    %141 = arith.mulf %138, %140 : vector<8x896xf32>
    %c0_79 = arith.constant 0 : index
    %c0_80 = arith.constant 0 : index
    %142 = vector.load %arg7[%c0_79, %c0_80] : memref<8x1xf32, #tpu.memory_space<vmem>>, vector<8x1xf32>
    %143 = vector.broadcast %142 : vector<8x1xf32> to vector<8x896xf32>
    %144 = arith.addf %141, %143 : vector<8x896xf32>
    %c854_i32_81 = arith.constant 854 : i32
    %145 = tpu.dynamic_rotate %38 by %c854_i32_81 dim 1 : vector<8x896xf32>, i32 -> vector<8x896xf32>
    %c0_82 = arith.constant 0 : index
    %c0_83 = arith.constant 0 : index
    %146 = vector.load %arg8[%c0_82, %c0_83] : memref<8x8xf32, #tpu.memory_space<vmem>>, vector<8x8xf32>
    %cst_84 = arith.constant dense<0.000000e+00> : vector<8x896xf32>
    %147 = tpu.matmul %146, %145, %cst_84 {dimension_numbers = #tpu.dot_dimension_numbers<[1], [0], [0], [1], [0, 0, 1, 1], [], []>} : vector<8x8xf32>, vector<8x896xf32>, vector<8x896xf32> -> vector<8x896xf32>
    %c0_85 = arith.constant 0 : index
    %c0_86 = arith.constant 0 : index
    %148 = vector.load %arg9[%c0_85, %c0_86] : memref<8x1xf32, #tpu.memory_space<vmem>>, vector<8x1xf32>
    %149 = vector.broadcast %148 : vector<8x1xf32> to vector<8x896xf32>
    %150 = arith.addf %147, %149 : vector<8x896xf32>
    %151 = arith.addf %144, %150 : vector<8x896xf32>
    %cst_87 = arith.constant 0.000000e+00 : f32
    %152 = vector.broadcast %cst_87 : f32 to vector<8x896xf32>
    %153 = arith.maximumf %151, %152 : vector<8x896xf32>
    %c0_88 = arith.constant 0 : index
    %c0_89 = arith.constant 0 : index
    %154 = vector.load %arg10[%c0_88, %c0_89] : memref<8x896xf32, #tpu.memory_space<vmem>>, vector<8x896xf32>
    tpu.vector_store %arg10[%c0_88, %c0_89], %153 {strides = array<i32>} : memref<8x896xf32, #tpu.memory_space<vmem>>, vector<8x896xf32>,
    return
  }
  func.func @transform_0(%arg0: i32) -> (i32, i32) {
    %c0_i32 = arith.constant 0 : i32
    %c0_i32_0 = arith.constant 0 : i32
    %c0_i32_1 = arith.constant 0 : i32
    return %c0_i32, %c0_i32_0 : i32, i32
  }
  func.func @transform_1(%arg0: i32) -> (i32, i32) {
    %c0_i32 = arith.constant 0 : i32
    %c0_i32_0 = arith.constant 0 : i32
    %c0_i32_1 = arith.constant 0 : i32
    return %c0_i32, %c0_i32_0 : i32, i32
  }
  func.func @transform_2(%arg0: i32) -> (i32, i32) {
    %c0_i32 = arith.constant 0 : i32
    %c0_i32_0 = arith.constant 0 : i32
    %c0_i32_1 = arith.constant 0 : i32
    return %c0_i32, %c0_i32_0 : i32, i32
  }
  func.func @transform_3(%arg0: i32) -> (i32, i32) {
    %c0_i32 = arith.constant 0 : i32
    %c0_i32_0 = arith.constant 0 : i32
    %c0_i32_1 = arith.constant 0 : i32
    return %c0_i32, %c0_i32_0 : i32, i32
  }
  func.func @transform_4(%arg0: i32) -> (i32, i32) {
    %c0_i32 = arith.constant 0 : i32
    %c0_i32_0 = arith.constant 0 : i32
    %c0_i32_1 = arith.constant 0 : i32
    return %c0_i32, %c0_i32_0 : i32, i32
  }
  func.func @transform_5(%arg0: i32) -> (i32, i32) {
    %c0_i32 = arith.constant 0 : i32
    %c0_i32_0 = arith.constant 0 : i32
    %c0_i32_1 = arith.constant 0 : i32
    return %c0_i32, %c0_i32_0 : i32, i32
  }
  func.func @transform_6(%arg0: i32) -> (i32, i32) {
    %c0_i32 = arith.constant 0 : i32
    %c0_i32_0 = arith.constant 0 : i32
    %c0_i32_1 = arith.constant 0 : i32
    return %c0_i32, %c0_i32_0 : i32, i32
  }
  func.func @transform_7(%arg0: i32) -> (i32, i32) {
    %c0_i32 = arith.constant 0 : i32
    %c0_i32_0 = arith.constant 0 : i32
    %c0_i32_1 = arith.constant 0 : i32
    return %c0_i32, %c0_i32_0 : i32, i32
  }
  func.func @transform_8(%arg0: i32) -> (i32, i32) {
    %c0_i32 = arith.constant 0 : i32
    %c0_i32_0 = arith.constant 0 : i32
    %c0_i32_1 = arith.constant 0 : i32
    return %c0_i32, %c0_i32_0 : i32, i32
  }
  func.func @transform_9(%arg0: i32) -> (i32, i32) {
    %c0_i32 = arith.constant 0 : i32
    %c0_i32_0 = arith.constant 0 : i32
    %c0_i32_1 = arith.constant 0 : i32
    return %c0_i32, %c0_i32_0 : i32, i32
  }
}

</mosaic_0001>

<llo_original>
// kernel: tpu_custom_call.1
$region0: #{tpu_custom_call.1}
  #allocation0 [shape = 'u32[]', space=smem, size = 0x4, offset = 0x4, fixed_abs, tag = 'smem constant byte address 0x4 - core index']
  #allocation1 [shape = 'u32[144,128]{1,0:T(1,128)}', space=vmem, size = 0x12000, scoped, tag = 'internal scratch']
  #allocation2 [shape = 'f32[72,896]{1,0:T(8,128)}', space=vmem, size = 0x3f000, scoped, tag = 'scratch operand']
  %s0 = inlined_call_operand.hbm [shape: f32[8,896], index: 0, kind: input, shape index: {}]
  %s1 = inlined_call_operand.vmem [shape: f32[8,72], index: 1, kind: input, shape index: {}]
  %s2 = inlined_call_operand.vmem [shape: f32[8,1], index: 2, kind: input, shape index: {}]
  %s3 = inlined_call_operand.vmem [shape: f32[8,1], index: 3, kind: input, shape index: {}]
  %s4 = inlined_call_operand.vmem [shape: f32[8,72], index: 4, kind: input, shape index: {}]
  %s5 = inlined_call_operand.vmem [shape: f32[8,1], index: 5, kind: input, shape index: {}]
  %s6 = inlined_call_operand.vmem [shape: f32[8,1], index: 6, kind: input, shape index: {}]
  %s7 = inlined_call_operand.vmem [shape: f32[8,8], index: 7, kind: input, shape index: {}]
  %s8 = inlined_call_operand.vmem [shape: f32[8,1], index: 8, kind: input, shape index: {}]
  %s9 = inlined_call_operand.hbm [shape: f32[8,896], index: 9, kind: output, shape index: {}]
  %s10 = sld [smem:[#allocation0]]
  $region50: #{tpu_custom_call.1} parent=0
    _
  %s12 = ssub.s32 1, %s10
  %s13 = scalar_select 0, %s12, %s10
  $region1: #{tpu_custom_call.1} parent=0
    #allocation3 [shape = 'u8[28672]{0}', space=vmem, size = 0x7000, scoped, tag = 'input window, operand 0, single buffered']
    #allocation4 [shape = 's32[1]{0}', space=sflag, size = 0x4, scoped, tag = 'scoped memory for tpu_custom_call.1']
    #allocation5 [shape = 's32[1]{0}', space=sflag, size = 0x4, scoped, tag = 'scoped memory for tpu_custom_call.1']
    #allocation6 [shape = 'u8[28672]{0}', space=vmem, size = 0x7000, scoped, tag = 'output window, operand 0, single buffered']
    %14 = vsyncpa [#allocation4], 0
    %15 = vsyncpa [#allocation5], 0
    // Predicated region
    $region2: #{tpu_custom_call.1} parent=1 // pred_check
      _
    $region3: #{tpu_custom_call.1} parent=1 // pred_check_branch
      %17 = sbr.rel (0) target = $region5
    $region4: #{tpu_custom_call.1} parent=1 // pred_region
      %s19 = ssub.s32 896, 896
      %20 = vsyncadd [#allocation4], %s19
      %s22 = sshll.u32 [#allocation3], 4
      %s23 = int_to_ptr.vmem [resolvable:$true] %s22
      %25 = dma.hbm_to_vmem [thread:$0]  %s0, 896, %s23, [#allocation4]
    $region5: #{tpu_custom_call.1} parent=1 // pred_fallthru
      _
    // Predicated region
    $region6: #{tpu_custom_call.1} parent=1 // pred_check
      _
    $region7: #{tpu_custom_call.1} parent=1 // pred_check_branch
      %27 = sbr.rel (0) target = $region9
    $region8: #{tpu_custom_call.1} parent=1 // pred_region
      _
    $region9: #{tpu_custom_call.1} parent=1 // pred_fallthru
      _
    // Predicated region
    $region10: #{tpu_custom_call.1} parent=1 // pred_check
      _
    $region11: #{tpu_custom_call.1} parent=1 // pred_check_branch
      %29 = sbr.rel (0) target = $region13
    $region12: #{tpu_custom_call.1} parent=1 // pred_region
      _
    $region13: #{tpu_custom_call.1} parent=1 // pred_fallthru
      _
    // Predicated region
    $region14: #{tpu_custom_call.1} parent=1 // pred_check
      _
    $region15: #{tpu_custom_call.1} parent=1 // pred_check_branch
      %31 = sbr.rel (0) target = $region17
    $region16: #{tpu_custom_call.1} parent=1 // pred_region
      _
    $region17: #{tpu_custom_call.1} parent=1 // pred_fallthru
      _
    // Predicated region
    $region18: #{tpu_custom_call.1} parent=1 // pred_check
      _
    $region19: #{tpu_custom_call.1} parent=1 // pred_check_branch
      %33 = sbr.rel (0) target = $region21
    $region20: #{tpu_custom_call.1} parent=1 // pred_region
      _
    $region21: #{tpu_custom_call.1} parent=1 // pred_fallthru
      _
    // Predicated region
    $region22: #{tpu_custom_call.1} parent=1 // pred_check
      _
    $region23: #{tpu_custom_call.1} parent=1 // pred_check_branch
      %35 = sbr.rel (0) target = $region25
    $region24: #{tpu_custom_call.1} parent=1 // pred_region
      _
    $region25: #{tpu_custom_call.1} parent=1 // pred_fallthru
      _
    // Predicated region
    $region26: #{tpu_custom_call.1} parent=1 // pred_check
      _
    $region27: #{tpu_custom_call.1} parent=1 // pred_check_branch
      %37 = sbr.rel (0) target = $region29
    $region28: #{tpu_custom_call.1} parent=1 // pred_region
      _
    $region29: #{tpu_custom_call.1} parent=1 // pred_fallthru
      _
    // Predicated region
    $region30: #{tpu_custom_call.1} parent=1 // pred_check
      _
    $region31: #{tpu_custom_call.1} parent=1 // pred_check_branch
      %39 = sbr.rel (0) target = $region33
    $region32: #{tpu_custom_call.1} parent=1 // pred_region
      _
    $region33: #{tpu_custom_call.1} parent=1 // pred_fallthru
      _
    // Predicated region
    $region34: #{tpu_custom_call.1} parent=1 // pred_check
      _
    $region35: #{tpu_custom_call.1} parent=1 // pred_check_branch
      %41 = sbr.rel (0) target = $region37
    $region36: #{tpu_custom_call.1} parent=1 // pred_region
      _
    $region37: #{tpu_custom_call.1} parent=1 // pred_fallthru
      _
    // Predicated region
    $region38: #{tpu_custom_call.1} parent=1 // pred_check
      _
    $region39: #{tpu_custom_call.1} parent=1 // pred_check_branch
      %43 = sbr.rel (0) target = $region41
    $region40: #{tpu_custom_call.1} parent=1 // pred_region
      %44 = dma.done [#allocation4], 896
    $region41: #{tpu_custom_call.1} parent=1 // pred_fallthru
      _
    %v45 = vlaneseq
    %v46 = vand.u32 %v45, 127
    %v47 = vadd.s32 %v46, 128
    %v48 = vadd.s32 %v46, 256
    %v49 = vadd.s32 %v46, 384
    %v50 = vadd.s32 %v46, 512
    %v51 = vadd.s32 %v46, 640
    %v52 = vadd.s32 %v46, 768
    %v53 = vcvt.s32.f32 %v46
    %v54 = vcvt.s32.f32 %v47
    %v55 = vcvt.s32.f32 %v48
    %v56 = vcvt.s32.f32 %v49
    %v57 = vcvt.s32.f32 %v50
    %v58 = vcvt.s32.f32 %v51
    %v59 = vcvt.s32.f32 %v52
    %v60 = vadd.f32 %v53, 0.5
    %v61 = vadd.f32 %v54, 0.5
    %v62 = vadd.f32 %v55, 0.5
    %v63 = vadd.f32 %v56, 0.5
    %v64 = vadd.f32 %v57, 0.5
    %v65 = vadd.f32 %v58, 0.5
    %v66 = vadd.f32 %v59, 0.5
    %v67 = vmul.f32 %v60, 0.05
    %v68 = vmul.f32 %v61, 0.05
    %v69 = vmul.f32 %v62, 0.05
    %v70 = vmul.f32 %v63, 0.05
    %v71 = vmul.f32 %v64, 0.05
    %v72 = vmul.f32 %v65, 0.05
    %v73 = vmul.f32 %v66, 0.05
    %v74 = vfloor.f32 %v67
    %v75 = vfloor.f32 %v68
    %v76 = vfloor.f32 %v69
    %v77 = vfloor.f32 %v70
    %v78 = vfloor.f32 %v71
    %v79 = vfloor.f32 %v72
    %v80 = vfloor.f32 %v73
    %v81 = vmul.f32 %v74, 20.0
    %v82 = vmul.f32 %v75, 20.0
    %v83 = vmul.f32 %v76, 20.0
    %v84 = vmul.f32 %v77, 20.0
    %v85 = vmul.f32 %v78, 20.0
    %v86 = vmul.f32 %v79, 20.0
    %v87 = vmul.f32 %v80, 20.0
    %v88 = vsub.f32 %v53, %v81
    %v89 = vsub.f32 %v54, %v82
    %v90 = vsub.f32 %v55, %v83
    %v91 = vsub.f32 %v56, %v84
    %v92 = vsub.f32 %v57, %v85
    %v93 = vsub.f32 %v58, %v86
    %v94 = vsub.f32 %v59, %v87
    %v95 = vadd.f32 %v74, 0.5
    %v96 = vadd.f32 %v75, 0.5
    %v97 = vadd.f32 %v76, 0.5
    %v98 = vadd.f32 %v77, 0.5
    %v99 = vadd.f32 %v78, 0.5
    %v100 = vadd.f32 %v79, 0.5
    %v101 = vadd.f32 %v80, 0.5
    %v102 = vmul.f32 %v95, 0.05
    %v103 = vmul.f32 %v96, 0.05
    %v104 = vmul.f32 %v97, 0.05
    %v105 = vmul.f32 %v98, 0.05
    %v106 = vmul.f32 %v99, 0.05
    %v107 = vmul.f32 %v100, 0.05
    %v108 = vmul.f32 %v101, 0.05
    %v109 = vfloor.f32 %v102
    %v110 = vfloor.f32 %v103
    %v111 = vfloor.f32 %v104
    %v112 = vfloor.f32 %v105
    %v113 = vfloor.f32 %v106
    %v114 = vfloor.f32 %v107
    %v115 = vfloor.f32 %v108
    %v116 = vmul.f32 %v109, 20.0
    %v117 = vmul.f32 %v110, 20.0
    %v118 = vmul.f32 %v111, 20.0
    %v119 = vmul.f32 %v112, 20.0
    %v120 = vmul.f32 %v113, 20.0
    %v121 = vmul.f32 %v114, 20.0
    %v122 = vmul.f32 %v115, 20.0
    %v123 = vsub.f32 %v74, %v116
    %v124 = vsub.f32 %v75, %v117
    %v125 = vsub.f32 %v76, %v118
    %v126 = vsub.f32 %v77, %v119
    %v127 = vsub.f32 %v78, %v120
    %v128 = vsub.f32 %v79, %v121
    %v129 = vsub.f32 %v80, %v122
    %vm130 = vcmp.lt.f32.partialorder %v53, 800.0
    %vm131 = vcmp.lt.f32.partialorder %v54, 800.0
    %vm132 = vcmp.lt.f32.partialorder %v55, 800.0
    %vm133 = vcmp.lt.f32.partialorder %v56, 800.0
    %vm134 = vcmp.lt.f32.partialorder %v57, 800.0
    %vm135 = vcmp.lt.f32.partialorder %v58, 800.0
    %vm136 = vcmp.lt.f32.partialorder %v59, 800.0
    %vm137 = vcmp.ge.f32.partialorder %v123, 1.0
    %vm138 = vcmp.ge.f32.partialorder %v124, 1.0
    %vm139 = vcmp.ge.f32.partialorder %v125, 1.0
    %vm140 = vcmp.ge.f32.partialorder %v126, 1.0
    %vm141 = vcmp.ge.f32.partialorder %v127, 1.0
    %vm142 = vcmp.ge.f32.partialorder %v128, 1.0
    %vm143 = vcmp.ge.f32.partialorder %v129, 1.0
    %vm144 = vmand %vm130, %vm137
    %vm145 = vmand %vm131, %vm138
    %vm146 = vmand %vm132, %vm139
    %vm147 = vmand %vm133, %vm140
    %vm148 = vmand %vm134, %vm141
    %vm149 = vmand %vm135, %vm142
    %vm150 = vmand %vm136, %vm143
    %vm151 = vcmp.le.f32.partialorder %v123, 16.0
    %vm152 = vcmp.le.f32.partialorder %v124, 16.0
    %vm153 = vcmp.le.f32.partialorder %v125, 16.0
    %vm154 = vcmp.le.f32.partialorder %v126, 16.0
    %vm155 = vcmp.le.f32.partialorder %v127, 16.0
    %vm156 = vcmp.le.f32.partialorder %v128, 16.0
    %vm157 = vcmp.le.f32.partialorder %v129, 16.0
    %vm158 = vmand %vm144, %vm151
    %vm159 = vmand %vm145, %vm152
    %vm160 = vmand %vm146, %vm153
    %vm161 = vmand %vm147, %vm154
    %vm162 = vmand %vm148, %vm155
    %vm163 = vmand %vm149, %vm156
    %vm164 = vmand %vm150, %vm157
    %vm165 = vcmp.ge.f32.partialorder %v88, 1.0
    %vm166 = vcmp.ge.f32.partialorder %v89, 1.0
    %vm167 = vcmp.ge.f32.partialorder %v90, 1.0
    %vm168 = vcmp.ge.f32.partialorder %v91, 1.0
    %vm169 = vcmp.ge.f32.partialorder %v92, 1.0
    %vm170 = vcmp.ge.f32.partialorder %v93, 1.0
    %vm171 = vcmp.ge.f32.partialorder %v94, 1.0
    %vm172 = vmand %vm158, %vm165
    %vm173 = vmand %vm159, %vm166
    %vm174 = vmand %vm160, %vm167
    %vm175 = vmand %vm161, %vm168
    %vm176 = vmand %vm162, %vm169
    %vm177 = vmand %vm163, %vm170
    %vm178 = vmand %vm164, %vm171
    %vm179 = vcmp.le.f32.partialorder %v88, 16.0
    %vm180 = vcmp.le.f32.partialorder %v89, 16.0
    %vm181 = vcmp.le.f32.partialorder %v90, 16.0
    %vm182 = vcmp.le.f32.partialorder %v91, 16.0
    %vm183 = vcmp.le.f32.partialorder %v92, 16.0
    %vm184 = vcmp.le.f32.partialorder %v93, 16.0
    %vm185 = vcmp.le.f32.partialorder %v94, 16.0
    %vm186 = vmand %vm172, %vm179
    %vm187 = vmand %vm173, %vm180
    %vm188 = vmand %vm174, %vm181
    %vm189 = vmand %vm175, %vm182
    %vm190 = vmand %vm176, %vm183
    %vm191 = vmand %vm177, %vm184
    %vm192 = vmand %vm178, %vm185
    %vm193 = vcmp.lt.f32.partialorder %v123, 16.0
    %vm194 = vcmp.lt.f32.partialorder %v124, 16.0
    %vm195 = vcmp.lt.f32.partialorder %v125, 16.0
    %vm196 = vcmp.lt.f32.partialorder %v126, 16.0
    %vm197 = vcmp.lt.f32.partialorder %v127, 16.0
    %vm198 = vcmp.lt.f32.partialorder %v128, 16.0
    %vm199 = vcmp.lt.f32.partialorder %v129, 16.0
    %vm200 = vmand %vm130, %vm193
    %vm201 = vmand %vm131, %vm194
    %vm202 = vmand %vm132, %vm195
    %vm203 = vmand %vm133, %vm196
    %vm204 = vmand %vm134, %vm197
    %vm205 = vmand %vm135, %vm198
    %vm206 = vmand %vm136, %vm199
    %vm207 = vcmp.lt.f32.partialorder %v88, 16.0
    %vm208 = vcmp.lt.f32.partialorder %v89, 16.0
    %vm209 = vcmp.lt.f32.partialorder %v90, 16.0
    %vm210 = vcmp.lt.f32.partialorder %v91, 16.0
    %vm211 = vcmp.lt.f32.partialorder %v92, 16.0
    %vm212 = vcmp.lt.f32.partialorder %v93, 16.0
    %vm213 = vcmp.lt.f32.partialorder %v94, 16.0
    %vm214 = vmand %vm200, %vm207
    %vm215 = vmand %vm201, %vm208
    %vm216 = vmand %vm202, %vm209
    %vm217 = vmand %vm203, %vm210
    %vm218 = vmand %vm204, %vm211
    %vm219 = vmand %vm205, %vm212
    %vm220 = vmand %vm206, %vm213
    %v221 = vld [vmem:[#allocation3] sm:$0xff]
    %v222 = vld [vmem:[#allocation3 + $0x8] sm:$0xff]
    %v223 = vld [vmem:[#allocation3 + $0x10] sm:$0xff]
    %v224 = vld [vmem:[#allocation3 + $0x18] sm:$0xff]
    %v225 = vld [vmem:[#allocation3 + $0x20] sm:$0xff]
    %v226 = vld [vmem:[#allocation3 + $0x28] sm:$0xff]
    %v227 = vld [vmem:[#allocation3 + $0x30] sm:$0xff]
    %v228 = vld [vmem:[%s1] sm:$0xff]
    %229 = vst [vmem:[#allocation2] sm:$0xff] %v221
    %230 = vst [vmem:[#allocation2 + $0x8] sm:$0xff] %v222
    %231 = vst [vmem:[#allocation2 + $0x10] sm:$0xff] %v223
    %232 = vst [vmem:[#allocation2 + $0x18] sm:$0xff] %v224
    %233 = vst [vmem:[#allocation2 + $0x20] sm:$0xff] %v225
    %234 = vst [vmem:[#allocation2 + $0x28] sm:$0xff] %v226
    %235 = vst [vmem:[#allocation2 + $0x30] sm:$0xff] %v227
    %236 = vrot.lane.b32.xlu0 %v221, 127
    %v237 = vpop.permute.xlu0 %236
    %238 = vrot.lane.b32.xlu0 %v222, 127
    %v239 = vpop.permute.xlu0 %238
    %240 = vrot.lane.b32.xlu0 %v223, 127
    %v241 = vpop.permute.xlu0 %240
    %242 = vrot.lane.b32.xlu0 %v224, 127
    %v243 = vpop.permute.xlu0 %242
    %244 = vrot.lane.b32.xlu0 %v225, 127
    %v245 = vpop.permute.xlu0 %244
    %246 = vrot.lane.b32.xlu0 %v226, 127
    %v247 = vpop.permute.xlu0 %246
    %248 = vrot.lane.b32.xlu0 %v227, 127
    %v249 = vpop.permute.xlu0 %248
    %vm250 = vcmp.lt.s32.totalorder %v46, 127
    %v251 = vsel %vm250, %v247, %v249
    %v252 = vsel %vm250, %v245, %v247
    %v253 = vsel %vm250, %v243, %v245
    %v254 = vsel %vm250, %v241, %v243
    %v255 = vsel %vm250, %v239, %v241
    %v256 = vsel %vm250, %v237, %v239
    %v257 = vsel %vm250, %v249, %v237
    %258 = vst [vmem:[#allocation2 + $0x38] sm:$0xff] %v256
    %259 = vst [vmem:[#allocation2 + $0x40] sm:$0xff] %v255
    %260 = vst [vmem:[#allocation2 + $0x48] sm:$0xff] %v254
    %261 = vst [vmem:[#allocation2 + $0x50] sm:$0xff] %v253
    %262 = vst [vmem:[#allocation2 + $0x58] sm:$0xff] %v252
    %263 = vst [vmem:[#allocation2 + $0x60] sm:$0xff] %v251
    %264 = vst [vmem:[#allocation2 + $0x68] sm:$0xff] %v257
    %265 = vrot.lane.b32.xlu0 %v221, 126
    %v266 = vpop.permute.xlu0 %265
    %267 = vrot.lane.b32.xlu0 %v222, 126
    %v268 = vpop.permute.xlu0 %267
    %269 = vrot.lane.b32.xlu0 %v223, 126
    %v270 = vpop.permute.xlu0 %269
    %271 = vrot.lane.b32.xlu0 %v224, 126
    %v272 = vpop.permute.xlu0 %271
    %273 = vrot.lane.b32.xlu0 %v225, 126
    %v274 = vpop.permute.xlu0 %273
    %275 = vrot.lane.b32.xlu0 %v226, 126
    %v276 = vpop.permute.xlu0 %275
    %277 = vrot.lane.b32.xlu0 %v227, 126
    %v278 = vpop.permute.xlu0 %277
    %vm279 = vcmp.lt.s32.totalorder %v46, 126
    %v280 = vsel %vm279, %v276, %v278
    %v281 = vsel %vm279, %v274, %v276
    %v282 = vsel %vm279, %v272, %v274
    %v283 = vsel %vm279, %v270, %v272
    %v284 = vsel %vm279, %v268, %v270
    %v285 = vsel %vm279, %v266, %v268
    %v286 = vsel %vm279, %v278, %v266
    %287 = vst [vmem:[#allocation2 + $0x70] sm:$0xff] %v285
    %288 = vst [vmem:[#allocation2 + $0x78] sm:$0xff] %v284
    %289 = vst [vmem:[#allocation2 + $0x80] sm:$0xff] %v283
    %290 = vst [vmem:[#allocation2 + $0x88] sm:$0xff] %v282
    %291 = vst [vmem:[#allocation2 + $0x90] sm:$0xff] %v281
    %292 = vst [vmem:[#allocation2 + $0x98] sm:$0xff] %v280
    %293 = vst [vmem:[#allocation2 + $0xa0] sm:$0xff] %v286
    %294 = vrot.lane.b32.xlu0 %v221, 108
    %v295 = vpop.permute.xlu0 %294
    %296 = vrot.lane.b32.xlu0 %v222, 108
    %v297 = vpop.permute.xlu0 %296
    %298 = vrot.lane.b32.xlu0 %v223, 108
    %v299 = vpop.permute.xlu0 %298
    %300 = vrot.lane.b32.xlu0 %v224, 108
    %v301 = vpop.permute.xlu0 %300
    %302 = vrot.lane.b32.xlu0 %v225, 108
    %v303 = vpop.permute.xlu0 %302
    %304 = vrot.lane.b32.xlu0 %v226, 108
    %v305 = vpop.permute.xlu0 %304
    %306 = vrot.lane.b32.xlu0 %v227, 108
    %v307 = vpop.permute.xlu0 %306
    %vm308 = vcmp.lt.s32.totalorder %v46, 108
    %v309 = vsel %vm308, %v305, %v307
    %v310 = vsel %vm308, %v303, %v305
    %v311 = vsel %vm308, %v301, %v303
    %v312 = vsel %vm308, %v299, %v301
    %v313 = vsel %vm308, %v297, %v299
    %v314 = vsel %vm308, %v295, %v297
    %v315 = vsel %vm308, %v307, %v295
    %316 = vst [vmem:[#allocation2 + $0xa8] sm:$0xff] %v314
    %317 = vst [vmem:[#allocation2 + $0xb0] sm:$0xff] %v313
    %318 = vst [vmem:[#allocation2 + $0xb8] sm:$0xff] %v312
    %319 = vst [vmem:[#allocation2 + $0xc0] sm:$0xff] %v311
    %320 = vst [vmem:[#allocation2 + $0xc8] sm:$0xff] %v310
    %321 = vst [vmem:[#allocation2 + $0xd0] sm:$0xff] %v309
    %322 = vst [vmem:[#allocation2 + $0xd8] sm:$0xff] %v315
    %323 = vrot.lane.b32.xlu0 %v221, 107
    %v324 = vpop.permute.xlu0 %323
    %325 = vrot.lane.b32.xlu0 %v222, 107
    %v326 = vpop.permute.xlu0 %325
    %327 = vrot.lane.b32.xlu0 %v223, 107
    %v328 = vpop.permute.xlu0 %327
    %329 = vrot.lane.b32.xlu0 %v224, 107
    %v330 = vpop.permute.xlu0 %329
    %331 = vrot.lane.b32.xlu0 %v225, 107
    %v332 = vpop.permute.xlu0 %331
    %333 = vrot.lane.b32.xlu0 %v226, 107
    %v334 = vpop.permute.xlu0 %333
    %335 = vrot.lane.b32.xlu0 %v227, 107
    %v336 = vpop.permute.xlu0 %335
    %vm337 = vcmp.lt.s32.totalorder %v46, 107
    %v338 = vsel %vm337, %v334, %v336
    %v339 = vsel %vm337, %v332, %v334
    %v340 = vsel %vm337, %v330, %v332
    %v341 = vsel %vm337, %v328, %v330
    %v342 = vsel %vm337, %v326, %v328
    %v343 = vsel %vm337, %v324, %v326
    %v344 = vsel %vm337, %v336, %v324
    %345 = vst [vmem:[#allocation2 + $0xe0] sm:$0xff] %v343
    %346 = vst [vmem:[#allocation2 + $0xe8] sm:$0xff] %v342
    %347 = vst [vmem:[#allocation2 + $0xf0] sm:$0xff] %v341
    %348 = vst [vmem:[#allocation2 + $0xf8] sm:$0xff] %v340
    %349 = vst [vmem:[#allocation2 + $0x100] sm:$0xff] %v339
    %350 = vst [vmem:[#allocation2 + $0x108] sm:$0xff] %v338
    %351 = vst [vmem:[#allocation2 + $0x110] sm:$0xff] %v344
    %352 = vrot.lane.b32.xlu0 %v221, 106
    %v353 = vpop.permute.xlu0 %352
    %354 = vrot.lane.b32.xlu0 %v222, 106
    %v355 = vpop.permute.xlu0 %354
    %356 = vrot.lane.b32.xlu0 %v223, 106
    %v357 = vpop.permute.xlu0 %356
    %358 = vrot.lane.b32.xlu0 %v224, 106
    %v359 = vpop.permute.xlu0 %358
    %360 = vrot.lane.b32.xlu0 %v225, 106
    %v361 = vpop.permute.xlu0 %360
    %362 = vrot.lane.b32.xlu0 %v226, 106
    %v363 = vpop.permute.xlu0 %362
    %364 = vrot.lane.b32.xlu0 %v227, 106
    %v365 = vpop.permute.xlu0 %364
    %vm366 = vcmp.lt.s32.totalorder %v46, 106
    %v367 = vsel %vm366, %v363, %v365
    %v368 = vsel %vm366, %v361, %v363
    %v369 = vsel %vm366, %v359, %v361
    %v370 = vsel %vm366, %v357, %v359
    %v371 = vsel %vm366, %v355, %v357
    %v372 = vsel %vm366, %v353, %v355
    %v373 = vsel %vm366, %v365, %v353
    %374 = vst [vmem:[#allocation2 + $0x118] sm:$0xff] %v372
    %375 = vst [vmem:[#allocation2 + $0x120] sm:$0xff] %v371
    %376 = vst [vmem:[#allocation2 + $0x128] sm:$0xff] %v370
    %377 = vst [vmem:[#allocation2 + $0x130] sm:$0xff] %v369
    %378 = vst [vmem:[#allocation2 + $0x138] sm:$0xff] %v368
    %379 = vst [vmem:[#allocation2 + $0x140] sm:$0xff] %v367
    %380 = vst [vmem:[#allocation2 + $0x148] sm:$0xff] %v373
    %381 = vrot.lane.b32.xlu0 %v221, 88
    %v382 = vpop.permute.xlu0 %381
    %383 = vrot.lane.b32.xlu0 %v222, 88
    %v384 = vpop.permute.xlu0 %383
    %385 = vrot.lane.b32.xlu0 %v223, 88
    %v386 = vpop.permute.xlu0 %385
    %387 = vrot.lane.b32.xlu0 %v224, 88
    %v388 = vpop.permute.xlu0 %387
    %389 = vrot.lane.b32.xlu0 %v225, 88
    %v390 = vpop.permute.xlu0 %389
    %391 = vrot.lane.b32.xlu0 %v226, 88
    %v392 = vpop.permute.xlu0 %391
    %393 = vrot.lane.b32.xlu0 %v227, 88
    %v394 = vpop.permute.xlu0 %393
    %vm395 = vcmp.lt.s32.totalorder %v46, 88
    %v396 = vsel %vm395, %v392, %v394
    %v397 = vsel %vm395, %v390, %v392
    %v398 = vsel %vm395, %v388, %v390
    %v399 = vsel %vm395, %v386, %v388
    %v400 = vsel %vm395, %v384, %v386
    %v401 = vsel %vm395, %v382, %v384
    %v402 = vsel %vm395, %v394, %v382
    %403 = vst [vmem:[#allocation2 + $0x150] sm:$0xff] %v401
    %404 = vst [vmem:[#allocation2 + $0x158] sm:$0xff] %v400
    %405 = vst [vmem:[#allocation2 + $0x160] sm:$0xff] %v399
    %406 = vst [vmem:[#allocation2 + $0x168] sm:$0xff] %v398
    %407 = vst [vmem:[#allocation2 + $0x170] sm:$0xff] %v397
    %408 = vst [vmem:[#allocation2 + $0x178] sm:$0xff] %v396
    %409 = vst [vmem:[#allocation2 + $0x180] sm:$0xff] %v402
    %410 = vrot.lane.b32.xlu0 %v221, 87
    %v411 = vpop.permute.xlu0 %410
    %412 = vrot.lane.b32.xlu0 %v222, 87
    %v413 = vpop.permute.xlu0 %412
    %414 = vrot.lane.b32.xlu0 %v223, 87
    %v415 = vpop.permute.xlu0 %414
    %416 = vrot.lane.b32.xlu0 %v224, 87
    %v417 = vpop.permute.xlu0 %416
    %418 = vrot.lane.b32.xlu0 %v225, 87
    %v419 = vpop.permute.xlu0 %418
    %420 = vrot.lane.b32.xlu0 %v226, 87
    %v421 = vpop.permute.xlu0 %420
    %422 = vrot.lane.b32.xlu0 %v227, 87
    %v423 = vpop.permute.xlu0 %422
    %vm424 = vcmp.lt.s32.totalorder %v46, 87
    %v425 = vsel %vm424, %v421, %v423
    %v426 = vsel %vm424, %v419, %v421
    %v427 = vsel %vm424, %v417, %v419
    %v428 = vsel %vm424, %v415, %v417
    %v429 = vsel %vm424, %v413, %v415
    %v430 = vsel %vm424, %v411, %v413
    %v431 = vsel %vm424, %v423, %v411
    %432 = vst [vmem:[#allocation2 + $0x188] sm:$0xff] %v430
    %433 = vst [vmem:[#allocation2 + $0x190] sm:$0xff] %v429
    %434 = vst [vmem:[#allocation2 + $0x198] sm:$0xff] %v428
    %435 = vst [vmem:[#allocation2 + $0x1a0] sm:$0xff] %v427
    %436 = vst [vmem:[#allocation2 + $0x1a8] sm:$0xff] %v426
    %437 = vst [vmem:[#allocation2 + $0x1b0] sm:$0xff] %v425
    %438 = vst [vmem:[#allocation2 + $0x1b8] sm:$0xff] %v431
    %439 = vrot.lane.b32.xlu0 %v221, 86
    %v440 = vpop.permute.xlu0 %439
    %441 = vrot.lane.b32.xlu0 %v222, 86
    %v442 = vpop.permute.xlu0 %441
    %443 = vrot.lane.b32.xlu0 %v223, 86
    %v444 = vpop.permute.xlu0 %443
    %445 = vrot.lane.b32.xlu0 %v224, 86
    %v446 = vpop.permute.xlu0 %445
    %447 = vrot.lane.b32.xlu0 %v225, 86
    %v448 = vpop.permute.xlu0 %447
    %449 = vrot.lane.b32.xlu0 %v226, 86
    %v450 = vpop.permute.xlu0 %449
    %451 = vrot.lane.b32.xlu0 %v227, 86
    %v452 = vpop.permute.xlu0 %451
    %vm453 = vcmp.lt.s32.totalorder %v46, 86
    %v454 = vsel %vm453, %v450, %v452
    %v455 = vsel %vm453, %v448, %v450
    %v456 = vsel %vm453, %v446, %v448
    %v457 = vsel %vm453, %v444, %v446
    %v458 = vsel %vm453, %v442, %v444
    %v459 = vsel %vm453, %v440, %v442
    %v460 = vsel %vm453, %v452, %v440
    %461 = vst [vmem:[#allocation2 + $0x1c0] sm:$0xff] %v459
    %462 = vst [vmem:[#allocation2 + $0x1c8] sm:$0xff] %v458
    %463 = vst [vmem:[#allocation2 + $0x1d0] sm:$0xff] %v457
    %464 = vst [vmem:[#allocation2 + $0x1d8] sm:$0xff] %v456
    %465 = vst [vmem:[#allocation2 + $0x1e0] sm:$0xff] %v455
    %466 = vst [vmem:[#allocation2 + $0x1e8] sm:$0xff] %v454
    %467 = vst [vmem:[#allocation2 + $0x1f0] sm:$0xff] %v460
    %v468 = vld [vmem:[#allocation2] sm:$0xff]
    %v469 = vld [vmem:[#allocation2 + $0x8] sm:$0xff]
    %v470 = vld [vmem:[#allocation2 + $0x10] sm:$0xff]
    %v471 = vld [vmem:[#allocation2 + $0x18] sm:$0xff]
    %v472 = vld [vmem:[#allocation2 + $0x20] sm:$0xff]
    %v473 = vld [vmem:[#allocation2 + $0x28] sm:$0xff]
    %v474 = vld [vmem:[#allocation2 + $0x30] sm:$0xff]
    %v475 = vld [vmem:[#allocation2 + $0x38] sm:$0xff]
    %v476 = vld [vmem:[#allocation2 + $0x40] sm:$0xff]
    %v477 = vld [vmem:[#allocation2 + $0x48] sm:$0xff]
    %v478 = vld [vmem:[#allocation2 + $0x50] sm:$0xff]
    %v479 = vld [vmem:[#allocation2 + $0x58] sm:$0xff]
    %v480 = vld [vmem:[#allocation2 + $0x60] sm:$0xff]
    %v481 = vld [vmem:[#allocation2 + $0x68] sm:$0xff]
    %v482 = vld [vmem:[#allocation2 + $0x70] sm:$0xff]
    %v483 = vld [vmem:[#allocation2 + $0x78] sm:$0xff]
    %v484 = vld [vmem:[#allocation2 + $0x80] sm:$0xff]
    %v485 = vld [vmem:[#allocation2 + $0x88] sm:$0xff]
    %v486 = vld [vmem:[#allocation2 + $0x90] sm:$0xff]
    %v487 = vld [vmem:[#allocation2 + $0x98] sm:$0xff]
    %v488 = vld [vmem:[#allocation2 + $0xa0] sm:$0xff]
    %v489 = vld [vmem:[#allocation2 + $0xa8] sm:$0xff]
    %v490 = vld [vmem:[#allocation2 + $0xb0] sm:$0xff]
    %v491 = vld [vmem:[#allocation2 + $0xb8] sm:$0xff]
    %v492 = vld [vmem:[#allocation2 + $0xc0] sm:$0xff]
    %v493 = vld [vmem:[#allocation2 + $0xc8] sm:$0xff]
    %v494 = vld [vmem:[#allocation2 + $0xd0] sm:$0xff]
    %v495 = vld [vmem:[#allocation2 + $0xd8] sm:$0xff]
    %v496 = vld [vmem:[#allocation2 + $0xe0] sm:$0xff]
    %v497 = vld [vmem:[#allocation2 + $0xe8] sm:$0xff]
    %v498 = vld [vmem:[#allocation2 + $0xf0] sm:$0xff]
    %v499 = vld [vmem:[#allocation2 + $0xf8] sm:$0xff]
    %v500 = vld [vmem:[#allocation2 + $0x100] sm:$0xff]
    %v501 = vld [vmem:[#allocation2 + $0x108] sm:$0xff]
    %v502 = vld [vmem:[#allocation2 + $0x110] sm:$0xff]
    %v503 = vld [vmem:[#allocation2 + $0x118] sm:$0xff]
    %v504 = vld [vmem:[#allocation2 + $0x120] sm:$0xff]
    %v505 = vld [vmem:[#allocation2 + $0x128] sm:$0xff]
    %v506 = vld [vmem:[#allocation2 + $0x130] sm:$0xff]
    %v507 = vld [vmem:[#allocation2 + $0x138] sm:$0xff]
    %v508 = vld [vmem:[#allocation2 + $0x140] sm:$0xff]
    %v509 = vld [vmem:[#allocation2 + $0x148] sm:$0xff]
    %v510 = vld [vmem:[#allocation2 + $0x150] sm:$0xff]
    %v511 = vld [vmem:[#allocation2 + $0x158] sm:$0xff]
    %v512 = vld [vmem:[#allocation2 + $0x160] sm:$0xff]
    %v513 = vld [vmem:[#allocation2 + $0x168] sm:$0xff]
    %v514 = vld [vmem:[#allocation2 + $0x170] sm:$0xff]
    %v515 = vld [vmem:[#allocation2 + $0x178] sm:$0xff]
    %v516 = vld [vmem:[#allocation2 + $0x180] sm:$0xff]
    %v517 = vld [vmem:[#allocation2 + $0x188] sm:$0xff]
    %v518 = vld [vmem:[#allocation2 + $0x190] sm:$0xff]
    %v519 = vld [vmem:[#allocation2 + $0x198] sm:$0xff]
    %v520 = vld [vmem:[#allocation2 + $0x1a0] sm:$0xff]
    %v521 = vld [vmem:[#allocation2 + $0x1a8] sm:$0xff]
    %v522 = vld [vmem:[#allocation2 + $0x1b0] sm:$0xff]
    %v523 = vld [vmem:[#allocation2 + $0x1b8] sm:$0xff]
    %v524 = vld [vmem:[#allocation2 + $0x1c0] sm:$0xff]
    %v525 = vld [vmem:[#allocation2 + $0x1c8] sm:$0xff]
    %v526 = vld [vmem:[#allocation2 + $0x1d0] sm:$0xff]
    %v527 = vld [vmem:[#allocation2 + $0x1d8] sm:$0xff]
    %v528 = vld [vmem:[#allocation2 + $0x1e0] sm:$0xff]
    %v529 = vld [vmem:[#allocation2 + $0x1e8] sm:$0xff]
    %v530 = vld [vmem:[#allocation2 + $0x1f0] sm:$0xff]
    %vm531 = vcmask 588800
    %v533 = vsel %vm531, %v228, 0
    %535 = vmatprep.subr.mxu0 0.0
    %536 = vmatpush1.msra.mxu0 0.0
    %537 = vmatprep.subr.mxu0 0.0
    %538 = vmatpush1.msra.mxu0 0.0
    %539 = vmatprep.subr.mxu0 0.0
    %540 = vmatpush1.msra.mxu0 0.0
    %541 = vmatprep.subr.mxu0 0.0
    %542 = vmatpush1.msra.mxu0 0.0
    %543 = vmatprep.subr.mxu0 0.0
    %544 = vmatpush1.msra.mxu0 0.0
    %545 = vmatprep.subr.mxu0 0.0
    %546 = vmatpush1.msra.mxu0 0.0
    %547 = vmatprep.subr.mxu0 0.0
    %548 = vmatpush1.msra.mxu0 0.0
    %549 = vmatprep.subr.mxu0 %v525
    %550 = vmatpush1.msra.mxu0 %v524
    %551 = vmatprep.subr.mxu0 %v518
    %552 = vmatpush1.msra.mxu0 %v517
    %553 = vmatprep.subr.mxu0 %v511
    %554 = vmatpush1.msra.mxu0 %v510
    %555 = vmatprep.subr.mxu0 %v504
    %556 = vmatpush1.msra.mxu0 %v503
    %557 = vmatprep.subr.mxu0 %v497
    %558 = vmatpush1.msra.mxu0 %v496
    %559 = vmatprep.subr.mxu0 %v490
    %560 = vmatpush1.msra.mxu0 %v489
    %561 = vmatprep.subr.mxu0 %v483
    %562 = vmatpush1.msra.mxu0 %v482
    %563 = vmatprep.subr.mxu0 %v476
    %564 = vmatpush1.msra.mxu0 %v475
    %565 = vmatprep.subr.mxu0 %v469
    %566 = vmatpush1.msra.mxu0 %v468
    %567 = vmatprep.subr.mxu0 0.0
    %568 = vmatpush2.msra.mxu0 0.0
    %569 = vmatprep.subr.mxu0 0.0
    %570 = vmatpush2.msra.mxu0 0.0
    %571 = vmatprep.subr.mxu0 0.0
    %572 = vmatpush2.msra.mxu0 0.0
    %573 = vmatprep.subr.mxu0 0.0
    %574 = vmatpush2.msra.mxu0 0.0
    %575 = vmatprep.subr.mxu0 0.0
    %576 = vmatpush2.msra.mxu0 0.0
    %577 = vmatprep.subr.mxu0 0.0
    %578 = vmatpush2.msra.mxu0 0.0
    %579 = vmatprep.subr.mxu0 0.0
    %580 = vmatpush2.msra.mxu0 0.0
    %581 = vmatprep.subr.mxu0 0.0
    %582 = vmatpush2.msra.mxu0 0.0
    %583 = vmatprep.subr.mxu0 0.0
    %584 = vmatpush2.msra.mxu0 0.0
    %585 = vmatprep.subr.mxu0 0.0
    %586 = vmatpush2.msra.mxu0 0.0
    %587 = vmatprep.subr.mxu0 0.0
    %588 = vmatpush2.msra.mxu0 0.0
    %589 = vmatprep.subr.mxu0 0.0
    %590 = vmatpush2.msra.mxu0 0.0
    %591 = vmatprep.subr.mxu0 0.0
    %592 = vmatpush2.msra.mxu0 0.0
    %593 = vmatprep.subr.mxu0 0.0
    %594 = vmatpush2.msra.mxu0 0.0
    %595 = vmatprep.subr.mxu0 0.0
    %596 = vmatpush2.msra.mxu0 0.0
    %597 = vmatprep.subr.mxu0 0.0
    %598 = vmatpush2.msra.mxu0 0.0
    %599 = vmatprep.mubr.f32.mxu0 0.0
    %600 = vmatmul.mubr.f32.gmra.mxu0 %v533
    %v601 = vpop.f32.mrf.mxu0
    %v602 = vadd.f32 0.0, %v601
    %v603 = vpop.f32.mrf.mxu0
    %v604 = vadd.f32 0.0, %v603
    %605 = vdwg.mxu0
    %606 = vmatprep.subr.mxu0 0.0
    %607 = vmatpush1.msra.mxu0 0.0
    %608 = vmatprep.subr.mxu0 0.0
    %609 = vmatpush1.msra.mxu0 0.0
    %610 = vmatprep.subr.mxu0 0.0
    %611 = vmatpush1.msra.mxu0 0.0
    %612 = vmatprep.subr.mxu0 0.0
    %613 = vmatpush1.msra.mxu0 0.0
    %614 = vmatprep.subr.mxu0 0.0
    %615 = vmatpush1.msra.mxu0 0.0
    %616 = vmatprep.subr.mxu0 0.0
    %617 = vmatpush1.msra.mxu0 0.0
    %618 = vmatprep.subr.mxu0 0.0
    %619 = vmatpush1.msra.mxu0 0.0
    %620 = vmatprep.subr.mxu0 %v527
    %621 = vmatpush1.msra.mxu0 %v526
    %622 = vmatprep.subr.mxu0 %v520
    %623 = vmatpush1.msra.mxu0 %v519
    %624 = vmatprep.subr.mxu0 %v513
    %625 = vmatpush1.msra.mxu0 %v512
    %626 = vmatprep.subr.mxu0 %v506
    %627 = vmatpush1.msra.mxu0 %v505
    %628 = vmatprep.subr.mxu0 %v499
    %629 = vmatpush1.msra.mxu0 %v498
    %630 = vmatprep.subr.mxu0 %v492
    %631 = vmatpush1.msra.mxu0 %v491
    %632 = vmatprep.subr.mxu0 %v485
    %633 = vmatpush1.msra.mxu0 %v484
    %634 = vmatprep.subr.mxu0 %v478
    %635 = vmatpush1.msra.mxu0 %v477
    %636 = vmatprep.subr.mxu0 %v471
    %637 = vmatpush1.msra.mxu0 %v470
    %638 = vmatprep.subr.mxu0 0.0
    %639 = vmatpush2.msra.mxu0 0.0
    %640 = vmatprep.subr.mxu0 0.0
    %641 = vmatpush2.msra.mxu0 0.0
    %642 = vmatprep.subr.mxu0 0.0
    %643 = vmatpush2.msra.mxu0 0.0
    %644 = vmatprep.subr.mxu0 0.0
    %645 = vmatpush2.msra.mxu0 0.0
    %646 = vmatprep.subr.mxu0 0.0
    %647 = vmatpush2.msra.mxu0 0.0
    %648 = vmatprep.subr.mxu0 0.0
    %649 = vmatpush2.msra.mxu0 0.0
    %650 = vmatprep.subr.mxu0 0.0
    %651 = vmatpush2.msra.mxu0 0.0
    %652 = vmatprep.subr.mxu0 0.0
    %653 = vmatpush2.msra.mxu0 0.0
    %654 = vmatprep.subr.mxu0 0.0
    %655 = vmatpush2.msra.mxu0 0.0
    %656 = vmatprep.subr.mxu0 0.0
    %657 = vmatpush2.msra.mxu0 0.0
    %658 = vmatprep.subr.mxu0 0.0
    %659 = vmatpush2.msra.mxu0 0.0
    %660 = vmatprep.subr.mxu0 0.0
    %661 = vmatpush2.msra.mxu0 0.0
    %662 = vmatprep.subr.mxu0 0.0
    %663 = vmatpush2.msra.mxu0 0.0
    %664 = vmatprep.subr.mxu0 0.0
    %665 = vmatpush2.msra.mxu0 0.0
    %666 = vmatprep.subr.mxu0 0.0
    %667 = vmatpush2.msra.mxu0 0.0
    %668 = vmatprep.subr.mxu0 0.0
    %669 = vmatpush2.msra.mxu0 0.0
    %670 = vmatprep.mubr.f32.mxu0 0.0
    %671 = vmatmul.mubr.f32.gmra.mxu0 %v533
    %v672 = vpop.f32.mrf.mxu0
    %v673 = vadd.f32 0.0, %v672
    %v674 = vpop.f32.mrf.mxu0
    %v675 = vadd.f32 0.0, %v674
    %676 = vdwg.mxu0
    %677 = vmatprep.subr.mxu0 0.0
    %678 = vmatpush1.msra.mxu0 0.0
    %679 = vmatprep.subr.mxu0 0.0
    %680 = vmatpush1.msra.mxu0 0.0
    %681 = vmatprep.subr.mxu0 0.0
    %682 = vmatpush1.msra.mxu0 0.0
    %683 = vmatprep.subr.mxu0 0.0
    %684 = vmatpush1.msra.mxu0 0.0
    %685 = vmatprep.subr.mxu0 0.0
    %686 = vmatpush1.msra.mxu0 0.0
    %687 = vmatprep.subr.mxu0 0.0
    %688 = vmatpush1.msra.mxu0 0.0
    %689 = vmatprep.subr.mxu0 0.0
    %690 = vmatpush1.msra.mxu0 0.0
    %691 = vmatprep.subr.mxu0 %v529
    %692 = vmatpush1.msra.mxu0 %v528
    %693 = vmatprep.subr.mxu0 %v522
    %694 = vmatpush1.msra.mxu0 %v521
    %695 = vmatprep.subr.mxu0 %v515
    %696 = vmatpush1.msra.mxu0 %v514
    %697 = vmatprep.subr.mxu0 %v508
    %698 = vmatpush1.msra.mxu0 %v507
    %699 = vmatprep.subr.mxu0 %v501
    %700 = vmatpush1.msra.mxu0 %v500
    %701 = vmatprep.subr.mxu0 %v494
    %702 = vmatpush1.msra.mxu0 %v493
    %703 = vmatprep.subr.mxu0 %v487
    %704 = vmatpush1.msra.mxu0 %v486
    %705 = vmatprep.subr.mxu0 %v480
    %706 = vmatpush1.msra.mxu0 %v479
    %707 = vmatprep.subr.mxu0 %v473
    %708 = vmatpush1.msra.mxu0 %v472
    %709 = vmatprep.subr.mxu0 0.0
    %710 = vmatpush2.msra.mxu0 0.0
    %711 = vmatprep.subr.mxu0 0.0
    %712 = vmatpush2.msra.mxu0 0.0
    %713 = vmatprep.subr.mxu0 0.0
    %714 = vmatpush2.msra.mxu0 0.0
    %715 = vmatprep.subr.mxu0 0.0
    %716 = vmatpush2.msra.mxu0 0.0
    %717 = vmatprep.subr.mxu0 0.0
    %718 = vmatpush2.msra.mxu0 0.0
    %719 = vmatprep.subr.mxu0 0.0
    %720 = vmatpush2.msra.mxu0 0.0
    %721 = vmatprep.subr.mxu0 0.0
    %722 = vmatpush2.msra.mxu0 0.0
    %723 = vmatprep.subr.mxu0 0.0
    %724 = vmatpush2.msra.mxu0 0.0
    %725 = vmatprep.subr.mxu0 0.0
    %726 = vmatpush2.msra.mxu0 0.0
    %727 = vmatprep.subr.mxu0 0.0
    %728 = vmatpush2.msra.mxu0 0.0
    %729 = vmatprep.subr.mxu0 0.0
    %730 = vmatpush2.msra.mxu0 0.0
    %731 = vmatprep.subr.mxu0 0.0
    %732 = vmatpush2.msra.mxu0 0.0
    %733 = vmatprep.subr.mxu0 0.0
    %734 = vmatpush2.msra.mxu0 0.0
    %735 = vmatprep.subr.mxu0 0.0
    %736 = vmatpush2.msra.mxu0 0.0
    %737 = vmatprep.subr.mxu0 0.0
    %738 = vmatpush2.msra.mxu0 0.0
    %739 = vmatprep.subr.mxu0 0.0
    %740 = vmatpush2.msra.mxu0 0.0
    %741 = vmatprep.mubr.f32.mxu0 0.0
    %742 = vmatmul.mubr.f32.gmra.mxu0 %v533
    %v743 = vpop.f32.mrf.mxu0
    %v744 = vadd.f32 0.0, %v743
    %v745 = vpop.f32.mrf.mxu0
    %v746 = vadd.f32 0.0, %v745
    %747 = vdwg.mxu0
    %748 = vmatprep.subr.mxu0 0.0
    %749 = vmatpush1.msra.mxu0 0.0
    %750 = vmatprep.subr.mxu0 0.0
    %751 = vmatpush1.msra.mxu0 0.0
    %752 = vmatprep.subr.mxu0 0.0
    %753 = vmatpush1.msra.mxu0 0.0
    %754 = vmatprep.subr.mxu0 0.0
    %755 = vmatpush1.msra.mxu0 0.0
    %756 = vmatprep.subr.mxu0 0.0
    %757 = vmatpush1.msra.mxu0 0.0
    %758 = vmatprep.subr.mxu0 0.0
    %759 = vmatpush1.msra.mxu0 0.0
    %760 = vmatprep.subr.mxu0 0.0
    %761 = vmatpush1.msra.mxu0 0.0
    %762 = vmatprep.subr.mxu0 0.0
    %763 = vmatpush1.msra.mxu0 %v530
    %764 = vmatprep.subr.mxu0 0.0
    %765 = vmatpush1.msra.mxu0 %v523
    %766 = vmatprep.subr.mxu0 0.0
    %767 = vmatpush1.msra.mxu0 %v516
    %768 = vmatprep.subr.mxu0 0.0
    %769 = vmatpush1.msra.mxu0 %v509
    %770 = vmatprep.subr.mxu0 0.0
    %771 = vmatpush1.msra.mxu0 %v502
    %772 = vmatprep.subr.mxu0 0.0
    %773 = vmatpush1.msra.mxu0 %v495
    %774 = vmatprep.subr.mxu0 0.0
    %775 = vmatpush1.msra.mxu0 %v488
    %776 = vmatprep.subr.mxu0 0.0
    %777 = vmatpush1.msra.mxu0 %v481
    %778 = vmatprep.subr.mxu0 0.0
    %779 = vmatpush1.msra.mxu0 %v474
    %780 = vmatprep.subr.mxu0 0.0
    %781 = vmatpush2.msra.mxu0 0.0
    %782 = vmatprep.subr.mxu0 0.0
    %783 = vmatpush2.msra.mxu0 0.0
    %784 = vmatprep.subr.mxu0 0.0
    %785 = vmatpush2.msra.mxu0 0.0
    %786 = vmatprep.subr.mxu0 0.0
    %787 = vmatpush2.msra.mxu0 0.0
    %788 = vmatprep.subr.mxu0 0.0
    %789 = vmatpush2.msra.mxu0 0.0
    %790 = vmatprep.subr.mxu0 0.0
    %791 = vmatpush2.msra.mxu0 0.0
    %792 = vmatprep.subr.mxu0 0.0
    %793 = vmatpush2.msra.mxu0 0.0
    %794 = vmatprep.subr.mxu0 0.0
    %795 = vmatpush2.msra.mxu0 0.0
    %796 = vmatprep.subr.mxu0 0.0
    %797 = vmatpush2.msra.mxu0 0.0
    %798 = vmatprep.subr.mxu0 0.0
    %799 = vmatpush2.msra.mxu0 0.0
    %800 = vmatprep.subr.mxu0 0.0
    %801 = vmatpush2.msra.mxu0 0.0
    %802 = vmatprep.subr.mxu0 0.0
    %803 = vmatpush2.msra.mxu0 0.0
    %804 = vmatprep.subr.mxu0 0.0
    %805 = vmatpush2.msra.mxu0 0.0
    %806 = vmatprep.subr.mxu0 0.0
    %807 = vmatpush2.msra.mxu0 0.0
    %808 = vmatprep.subr.mxu0 0.0
    %809 = vmatpush2.msra.mxu0 0.0
    %810 = vmatprep.subr.mxu0 0.0
    %811 = vmatpush2.msra.mxu0 0.0
    %812 = vmatprep.mubr.f32.mxu0 0.0
    %813 = vmatmul.mubr.f32.gmra.mxu0 %v533
    %v814 = vpop.f32.mrf.mxu0
    %v815 = vadd.f32 0.0, %v814
    %v816 = vpop.f32.mrf.mxu0
    %817 = vdwg.mxu0
    %v818 = vsel %vm186, 1, 0
    %v819 = vsel %vm187, 1, 0
    %v820 = vsel %vm188, 1, 0
    %v821 = vsel %vm189, 1, 0
    %v822 = vsel %vm190, 1, 0
    %v823 = vsel %vm191, 1, 0
    %v824 = vsel %vm192, 1, 0
    %v825 = vcvt.s32.f32 %v818
    %v826 = vcvt.s32.f32 %v819
    %v827 = vcvt.s32.f32 %v820
    %v828 = vcvt.s32.f32 %v821
    %v829 = vcvt.s32.f32 %v822
    %v830 = vcvt.s32.f32 %v823
    %v831 = vcvt.s32.f32 %v824
    %v832 = vmul.f32 %v602, %v825
    %v833 = vmul.f32 %v604, %v826
    %v834 = vmul.f32 %v673, %v827
    %v835 = vmul.f32 %v675, %v828
    %v836 = vmul.f32 %v744, %v829
    %v837 = vmul.f32 %v746, %v830
    %v838 = vmul.f32 %v815, %v831
    %v839 = vadd.f32 %v832, %v833
    %v840 = vadd.f32 %v839, %v834
    %v841 = vadd.f32 %v840, %v835
    %v842 = vadd.f32 %v841, %v836
    %v843 = vadd.f32 %v842, %v837
    %v844 = vadd.f32 %v843, %v838
    %845 = vadd.xlane.f32.xlu0 %v844
    %v846 = vpop.xlane.xlu0 %845
    %v847 = vmul.f32 %v832, %v602
    %v848 = vmul.f32 %v833, %v604
    %v849 = vmul.f32 %v834, %v673
    %v850 = vmul.f32 %v835, %v675
    %v851 = vmul.f32 %v836, %v744
    %v852 = vmul.f32 %v837, %v746
    %v853 = vmul.f32 %v838, %v815
    %v854 = vadd.f32 %v847, %v848
    %v855 = vadd.f32 %v854, %v849
    %v856 = vadd.f32 %v855, %v850
    %v857 = vadd.f32 %v856, %v851
    %v858 = vadd.f32 %v857, %v852
    %v859 = vadd.f32 %v858, %v853
    %860 = vadd.xlane.f32.xlu0 %v859
    %v861 = vpop.xlane.xlu0 %860
    %v862 = vmul.f32 %v846, 0.001953125
    %v863 = vmul.f32 %v861, 0.001953125
    %v864 = vmul.f32 %v862, %v862
    %v865 = vsub.f32 %v863, %v864
    %v866 = vmax.f32 %v865, 0.0
    %v867 = vsub.f32 %v602, %v862
    %v868 = vsub.f32 %v604, %v862
    %v869 = vsub.f32 %v673, %v862
    %v870 = vsub.f32 %v675, %v862
    %v871 = vsub.f32 %v744, %v862
    %v872 = vsub.f32 %v746, %v862
    %v873 = vsub.f32 %v815, %v862
    %v874 = vadd.f32 %v866, 1e-05
    %v875 = vrsqrt.pop %v874
    %v876 = vmul.f32 %v867, %v875
    %v877 = vmul.f32 %v868, %v875
    %v878 = vmul.f32 %v869, %v875
    %v879 = vmul.f32 %v870, %v875
    %v880 = vmul.f32 %v871, %v875
    %v881 = vmul.f32 %v872, %v875
    %v882 = vmul.f32 %v873, %v875
    %v883 = vld [vmem:[%s2] sm:$0xff]
    %885 = vset.pattern.permute.xlu0 0
    %886 = vperm.xlu0 %885, %v883
    %v887 = vpop.permute.xlu0 %886
    %v889 = vmul.f32 %v876, %v887
    %v890 = vmul.f32 %v877, %v887
    %v891 = vmul.f32 %v878, %v887
    %v892 = vmul.f32 %v879, %v887
    %v893 = vmul.f32 %v880, %v887
    %v894 = vmul.f32 %v881, %v887
    %v895 = vmul.f32 %v882, %v887
    %v896 = vld [vmem:[%s3] sm:$0xff]
    %898 = vset.pattern.permute.xlu0 0
    %899 = vperm.xlu0 %898, %v896
    %v900 = vpop.permute.xlu0 %899
    %v902 = vadd.f32 %v889, %v900
    %v903 = vadd.f32 %v890, %v900
    %v904 = vadd.f32 %v891, %v900
    %v905 = vadd.f32 %v892, %v900
    %v906 = vadd.f32 %v893, %v900
    %v907 = vadd.f32 %v894, %v900
    %v908 = vadd.f32 %v895, %v900
    %v909 = vmax.f32 %v902, 0.0
    %v910 = vmax.f32 %v903, 0.0
    %v911 = vmax.f32 %v904, 0.0
    %v912 = vmax.f32 %v905, 0.0
    %v913 = vmax.f32 %v906, 0.0
    %v914 = vmax.f32 %v907, 0.0
    %v915 = vmax.f32 %v908, 0.0
    %vm916 = vcmp.eq.s32.totalorder %v818, 1
    %vm917 = vcmp.eq.s32.totalorder %v819, 1
    %vm918 = vcmp.eq.s32.totalorder %v820, 1
    %vm919 = vcmp.eq.s32.totalorder %v821, 1
    %vm920 = vcmp.eq.s32.totalorder %v822, 1
    %vm921 = vcmp.eq.s32.totalorder %v823, 1
    %vm922 = vcmp.eq.s32.totalorder %v824, 1
    %v923 = vsel %vm916, %v909, 0.0
    %v924 = vsel %vm917, %v910, 0.0
    %v925 = vsel %vm918, %v911, 0.0
    %v926 = vsel %vm919, %v912, 0.0
    %v927 = vsel %vm920, %v913, 0.0
    %v928 = vsel %vm921, %v914, 0.0
    %v929 = vsel %vm922, %v915, 0.0
    %v930 = vld [vmem:[%s4] sm:$0xff]
    %931 = vst [vmem:[#allocation2] sm:$0xff] %v923
    %932 = vst [vmem:[#allocation2 + $0x8] sm:$0xff] %v924
    %933 = vst [vmem:[#allocation2 + $0x10] sm:$0xff] %v925
    %934 = vst [vmem:[#allocation2 + $0x18] sm:$0xff] %v926
    %935 = vst [vmem:[#allocation2 + $0x20] sm:$0xff] %v927
    %936 = vst [vmem:[#allocation2 + $0x28] sm:$0xff] %v928
    %937 = vst [vmem:[#allocation2 + $0x30] sm:$0xff] %v929
    %938 = vrot.lane.b32.xlu0 %v923, 127
    %v939 = vpop.permute.xlu0 %938
    %940 = vrot.lane.b32.xlu0 %v924, 127
    %v941 = vpop.permute.xlu0 %940
    %942 = vrot.lane.b32.xlu0 %v925, 127
    %v943 = vpop.permute.xlu0 %942
    %944 = vrot.lane.b32.xlu0 %v926, 127
    %v945 = vpop.permute.xlu0 %944
    %946 = vrot.lane.b32.xlu0 %v927, 127
    %v947 = vpop.permute.xlu0 %946
    %948 = vrot.lane.b32.xlu0 %v928, 127
    %v949 = vpop.permute.xlu0 %948
    %950 = vrot.lane.b32.xlu0 %v929, 127
    %v951 = vpop.permute.xlu0 %950
    %v952 = vsel %vm250, %v949, %v951
    %v953 = vsel %vm250, %v947, %v949
    %v954 = vsel %vm250, %v945, %v947
    %v955 = vsel %vm250, %v943, %v945
    %v956 = vsel %vm250, %v941, %v943
    %v957 = vsel %vm250, %v939, %v941
    %v958 = vsel %vm250, %v951, %v939
    %959 = vst [vmem:[#allocation2 + $0x38] sm:$0xff] %v957
    %960 = vst [vmem:[#allocation2 + $0x40] sm:$0xff] %v956
    %961 = vst [vmem:[#allocation2 + $0x48] sm:$0xff] %v955
    %962 = vst [vmem:[#allocation2 + $0x50] sm:$0xff] %v954
    %963 = vst [vmem:[#allocation2 + $0x58] sm:$0xff] %v953
    %964 = vst [vmem:[#allocation2 + $0x60] sm:$0xff] %v952
    %965 = vst [vmem:[#allocation2 + $0x68] sm:$0xff] %v958
    %966 = vrot.lane.b32.xlu0 %v923, 126
    %v967 = vpop.permute.xlu0 %966
    %968 = vrot.lane.b32.xlu0 %v924, 126
    %v969 = vpop.permute.xlu0 %968
    %970 = vrot.lane.b32.xlu0 %v925, 126
    %v971 = vpop.permute.xlu0 %970
    %972 = vrot.lane.b32.xlu0 %v926, 126
    %v973 = vpop.permute.xlu0 %972
    %974 = vrot.lane.b32.xlu0 %v927, 126
    %v975 = vpop.permute.xlu0 %974
    %976 = vrot.lane.b32.xlu0 %v928, 126
    %v977 = vpop.permute.xlu0 %976
    %978 = vrot.lane.b32.xlu0 %v929, 126
    %v979 = vpop.permute.xlu0 %978
    %v980 = vsel %vm279, %v977, %v979
    %v981 = vsel %vm279, %v975, %v977
    %v982 = vsel %vm279, %v973, %v975
    %v983 = vsel %vm279, %v971, %v973
    %v984 = vsel %vm279, %v969, %v971
    %v985 = vsel %vm279, %v967, %v969
    %v986 = vsel %vm279, %v979, %v967
    %987 = vst [vmem:[#allocation2 + $0x70] sm:$0xff] %v985
    %988 = vst [vmem:[#allocation2 + $0x78] sm:$0xff] %v984
    %989 = vst [vmem:[#allocation2 + $0x80] sm:$0xff] %v983
    %990 = vst [vmem:[#allocation2 + $0x88] sm:$0xff] %v982
    %991 = vst [vmem:[#allocation2 + $0x90] sm:$0xff] %v981
    %992 = vst [vmem:[#allocation2 + $0x98] sm:$0xff] %v980
    %993 = vst [vmem:[#allocation2 + $0xa0] sm:$0xff] %v986
    %994 = vrot.lane.b32.xlu0 %v923, 108
    %v995 = vpop.permute.xlu0 %994
    %996 = vrot.lane.b32.xlu0 %v924, 108
    %v997 = vpop.permute.xlu0 %996
    %998 = vrot.lane.b32.xlu0 %v925, 108
    %v999 = vpop.permute.xlu0 %998
    %1000 = vrot.lane.b32.xlu0 %v926, 108
    %v1001 = vpop.permute.xlu0 %1000
    %1002 = vrot.lane.b32.xlu0 %v927, 108
    %v1003 = vpop.permute.xlu0 %1002
    %1004 = vrot.lane.b32.xlu0 %v928, 108
    %v1005 = vpop.permute.xlu0 %1004
    %1006 = vrot.lane.b32.xlu0 %v929, 108
    %v1007 = vpop.permute.xlu0 %1006
    %v1008 = vsel %vm308, %v1005, %v1007
    %v1009 = vsel %vm308, %v1003, %v1005
    %v1010 = vsel %vm308, %v1001, %v1003
    %v1011 = vsel %vm308, %v999, %v1001
    %v1012 = vsel %vm308, %v997, %v999
    %v1013 = vsel %vm308, %v995, %v997
    %v1014 = vsel %vm308, %v1007, %v995
    %1015 = vst [vmem:[#allocation2 + $0xa8] sm:$0xff] %v1013
    %1016 = vst [vmem:[#allocation2 + $0xb0] sm:$0xff] %v1012
    %1017 = vst [vmem:[#allocation2 + $0xb8] sm:$0xff] %v1011
    %1018 = vst [vmem:[#allocation2 + $0xc0] sm:$0xff] %v1010
    %1019 = vst [vmem:[#allocation2 + $0xc8] sm:$0xff] %v1009
    %1020 = vst [vmem:[#allocation2 + $0xd0] sm:$0xff] %v1008
    %1021 = vst [vmem:[#allocation2 + $0xd8] sm:$0xff] %v1014
    %1022 = vrot.lane.b32.xlu0 %v923, 107
    %v1023 = vpop.permute.xlu0 %1022
    %1024 = vrot.lane.b32.xlu0 %v924, 107
    %v1025 = vpop.permute.xlu0 %1024
    %1026 = vrot.lane.b32.xlu0 %v925, 107
    %v1027 = vpop.permute.xlu0 %1026
    %1028 = vrot.lane.b32.xlu0 %v926, 107
    %v1029 = vpop.permute.xlu0 %1028
    %1030 = vrot.lane.b32.xlu0 %v927, 107
    %v1031 = vpop.permute.xlu0 %1030
    %1032 = vrot.lane.b32.xlu0 %v928, 107
    %v1033 = vpop.permute.xlu0 %1032
    %1034 = vrot.lane.b32.xlu0 %v929, 107
    %v1035 = vpop.permute.xlu0 %1034
    %v1036 = vsel %vm337, %v1033, %v1035
    %v1037 = vsel %vm337, %v1031, %v1033
    %v1038 = vsel %vm337, %v1029, %v1031
    %v1039 = vsel %vm337, %v1027, %v1029
    %v1040 = vsel %vm337, %v1025, %v1027
    %v1041 = vsel %vm337, %v1023, %v1025
    %v1042 = vsel %vm337, %v1035, %v1023
    %1043 = vst [vmem:[#allocation2 + $0xe0] sm:$0xff] %v1041
    %1044 = vst [vmem:[#allocation2 + $0xe8] sm:$0xff] %v1040
    %1045 = vst [vmem:[#allocation2 + $0xf0] sm:$0xff] %v1039
    %1046 = vst [vmem:[#allocation2 + $0xf8] sm:$0xff] %v1038
    %1047 = vst [vmem:[#allocation2 + $0x100] sm:$0xff] %v1037
    %1048 = vst [vmem:[#allocation2 + $0x108] sm:$0xff] %v1036
    %1049 = vst [vmem:[#allocation2 + $0x110] sm:$0xff] %v1042
    %1050 = vrot.lane.b32.xlu0 %v923, 106
    %v1051 = vpop.permute.xlu0 %1050
    %1052 = vrot.lane.b32.xlu0 %v924, 106
    %v1053 = vpop.permute.xlu0 %1052
    %1054 = vrot.lane.b32.xlu0 %v925, 106
    %v1055 = vpop.permute.xlu0 %1054
    %1056 = vrot.lane.b32.xlu0 %v926, 106
    %v1057 = vpop.permute.xlu0 %1056
    %1058 = vrot.lane.b32.xlu0 %v927, 106
    %v1059 = vpop.permute.xlu0 %1058
    %1060 = vrot.lane.b32.xlu0 %v928, 106
    %v1061 = vpop.permute.xlu0 %1060
    %1062 = vrot.lane.b32.xlu0 %v929, 106
    %v1063 = vpop.permute.xlu0 %1062
    %v1064 = vsel %vm366, %v1061, %v1063
    %v1065 = vsel %vm366, %v1059, %v1061
    %v1066 = vsel %vm366, %v1057, %v1059
    %v1067 = vsel %vm366, %v1055, %v1057
    %v1068 = vsel %vm366, %v1053, %v1055
    %v1069 = vsel %vm366, %v1051, %v1053
    %v1070 = vsel %vm366, %v1063, %v1051
    %1071 = vst [vmem:[#allocation2 + $0x118] sm:$0xff] %v1069
    %1072 = vst [vmem:[#allocation2 + $0x120] sm:$0xff] %v1068
    %1073 = vst [vmem:[#allocation2 + $0x128] sm:$0xff] %v1067
    %1074 = vst [vmem:[#allocation2 + $0x130] sm:$0xff] %v1066
    %1075 = vst [vmem:[#allocation2 + $0x138] sm:$0xff] %v1065
    %1076 = vst [vmem:[#allocation2 + $0x140] sm:$0xff] %v1064
    %1077 = vst [vmem:[#allocation2 + $0x148] sm:$0xff] %v1070
    %1078 = vrot.lane.b32.xlu0 %v923, 88
    %v1079 = vpop.permute.xlu0 %1078
    %1080 = vrot.lane.b32.xlu0 %v924, 88
    %v1081 = vpop.permute.xlu0 %1080
    %1082 = vrot.lane.b32.xlu0 %v925, 88
    %v1083 = vpop.permute.xlu0 %1082
    %1084 = vrot.lane.b32.xlu0 %v926, 88
    %v1085 = vpop.permute.xlu0 %1084
    %1086 = vrot.lane.b32.xlu0 %v927, 88
    %v1087 = vpop.permute.xlu0 %1086
    %1088 = vrot.lane.b32.xlu0 %v928, 88
    %v1089 = vpop.permute.xlu0 %1088
    %1090 = vrot.lane.b32.xlu0 %v929, 88
    %v1091 = vpop.permute.xlu0 %1090
    %v1092 = vsel %vm395, %v1089, %v1091
    %v1093 = vsel %vm395, %v1087, %v1089
    %v1094 = vsel %vm395, %v1085, %v1087
    %v1095 = vsel %vm395, %v1083, %v1085
    %v1096 = vsel %vm395, %v1081, %v1083
    %v1097 = vsel %vm395, %v1079, %v1081
    %v1098 = vsel %vm395, %v1091, %v1079
    %1099 = vst [vmem:[#allocation2 + $0x150] sm:$0xff] %v1097
    %1100 = vst [vmem:[#allocation2 + $0x158] sm:$0xff] %v1096
    %1101 = vst [vmem:[#allocation2 + $0x160] sm:$0xff] %v1095
    %1102 = vst [vmem:[#allocation2 + $0x168] sm:$0xff] %v1094
    %1103 = vst [vmem:[#allocation2 + $0x170] sm:$0xff] %v1093
    %1104 = vst [vmem:[#allocation2 + $0x178] sm:$0xff] %v1092
    %1105 = vst [vmem:[#allocation2 + $0x180] sm:$0xff] %v1098
    %1106 = vrot.lane.b32.xlu0 %v923, 87
    %v1107 = vpop.permute.xlu0 %1106
    %1108 = vrot.lane.b32.xlu0 %v924, 87
    %v1109 = vpop.permute.xlu0 %1108
    %1110 = vrot.lane.b32.xlu0 %v925, 87
    %v1111 = vpop.permute.xlu0 %1110
    %1112 = vrot.lane.b32.xlu0 %v926, 87
    %v1113 = vpop.permute.xlu0 %1112
    %1114 = vrot.lane.b32.xlu0 %v927, 87
    %v1115 = vpop.permute.xlu0 %1114
    %1116 = vrot.lane.b32.xlu0 %v928, 87
    %v1117 = vpop.permute.xlu0 %1116
    %1118 = vrot.lane.b32.xlu0 %v929, 87
    %v1119 = vpop.permute.xlu0 %1118
    %v1120 = vsel %vm424, %v1117, %v1119
    %v1121 = vsel %vm424, %v1115, %v1117
    %v1122 = vsel %vm424, %v1113, %v1115
    %v1123 = vsel %vm424, %v1111, %v1113
    %v1124 = vsel %vm424, %v1109, %v1111
    %v1125 = vsel %vm424, %v1107, %v1109
    %v1126 = vsel %vm424, %v1119, %v1107
    %1127 = vst [vmem:[#allocation2 + $0x188] sm:$0xff] %v1125
    %1128 = vst [vmem:[#allocation2 + $0x190] sm:$0xff] %v1124
    %1129 = vst [vmem:[#allocation2 + $0x198] sm:$0xff] %v1123
    %1130 = vst [vmem:[#allocation2 + $0x1a0] sm:$0xff] %v1122
    %1131 = vst [vmem:[#allocation2 + $0x1a8] sm:$0xff] %v1121
    %1132 = vst [vmem:[#allocation2 + $0x1b0] sm:$0xff] %v1120
    %1133 = vst [vmem:[#allocation2 + $0x1b8] sm:$0xff] %v1126
    %1134 = vrot.lane.b32.xlu0 %v923, 86
    %v1135 = vpop.permute.xlu0 %1134
    %1136 = vrot.lane.b32.xlu0 %v924, 86
    %v1137 = vpop.permute.xlu0 %1136
    %1138 = vrot.lane.b32.xlu0 %v925, 86
    %v1139 = vpop.permute.xlu0 %1138
    %1140 = vrot.lane.b32.xlu0 %v926, 86
    %v1141 = vpop.permute.xlu0 %1140
    %1142 = vrot.lane.b32.xlu0 %v927, 86
    %v1143 = vpop.permute.xlu0 %1142
    %1144 = vrot.lane.b32.xlu0 %v928, 86
    %v1145 = vpop.permute.xlu0 %1144
    %1146 = vrot.lane.b32.xlu0 %v929, 86
    %v1147 = vpop.permute.xlu0 %1146
    %v1148 = vsel %vm453, %v1145, %v1147
    %v1149 = vsel %vm453, %v1143, %v1145
    %v1150 = vsel %vm453, %v1141, %v1143
    %v1151 = vsel %vm453, %v1139, %v1141
    %v1152 = vsel %vm453, %v1137, %v1139
    %v1153 = vsel %vm453, %v1135, %v1137
    %v1154 = vsel %vm453, %v1147, %v1135
    %1155 = vst [vmem:[#allocation2 + $0x1c0] sm:$0xff] %v1153
    %1156 = vst [vmem:[#allocation2 + $0x1c8] sm:$0xff] %v1152
    %1157 = vst [vmem:[#allocation2 + $0x1d0] sm:$0xff] %v1151
    %1158 = vst [vmem:[#allocation2 + $0x1d8] sm:$0xff] %v1150
    %1159 = vst [vmem:[#allocation2 + $0x1e0] sm:$0xff] %v1149
    %1160 = vst [vmem:[#allocation2 + $0x1e8] sm:$0xff] %v1148
    %1161 = vst [vmem:[#allocation2 + $0x1f0] sm:$0xff] %v1154
    %v1162 = vld [vmem:[#allocation2] sm:$0xff]
    %v1163 = vld [vmem:[#allocation2 + $0x8] sm:$0xff]
    %v1164 = vld [vmem:[#allocation2 + $0x10] sm:$0xff]
    %v1165 = vld [vmem:[#allocation2 + $0x18] sm:$0xff]
    %v1166 = vld [vmem:[#allocation2 + $0x20] sm:$0xff]
    %v1167 = vld [vmem:[#allocation2 + $0x28] sm:$0xff]
    %v1168 = vld [vmem:[#allocation2 + $0x30] sm:$0xff]
    %v1169 = vld [vmem:[#allocation2 + $0x38] sm:$0xff]
    %v1170 = vld [vmem:[#allocation2 + $0x40] sm:$0xff]
    %v1171 = vld [vmem:[#allocation2 + $0x48] sm:$0xff]
    %v1172 = vld [vmem:[#allocation2 + $0x50] sm:$0xff]
    %v1173 = vld [vmem:[#allocation2 + $0x58] sm:$0xff]
    %v1174 = vld [vmem:[#allocation2 + $0x60] sm:$0xff]
    %v1175 = vld [vmem:[#allocation2 + $0x68] sm:$0xff]
    %v1176 = vld [vmem:[#allocation2 + $0x70] sm:$0xff]
    %v1177 = vld [vmem:[#allocation2 + $0x78] sm:$0xff]
    %v1178 = vld [vmem:[#allocation2 + $0x80] sm:$0xff]
    %v1179 = vld [vmem:[#allocation2 + $0x88] sm:$0xff]
    %v1180 = vld [vmem:[#allocation2 + $0x90] sm:$0xff]
    %v1181 = vld [vmem:[#allocation2 + $0x98] sm:$0xff]
    %v1182 = vld [vmem:[#allocation2 + $0xa0] sm:$0xff]
    %v1183 = vld [vmem:[#allocation2 + $0xa8] sm:$0xff]
    %v1184 = vld [vmem:[#allocation2 + $0xb0] sm:$0xff]
    %v1185 = vld [vmem:[#allocation2 + $0xb8] sm:$0xff]
    %v1186 = vld [vmem:[#allocation2 + $0xc0] sm:$0xff]
    %v1187 = vld [vmem:[#allocation2 + $0xc8] sm:$0xff]
    %v1188 = vld [vmem:[#allocation2 + $0xd0] sm:$0xff]
    %v1189 = vld [vmem:[#allocation2 + $0xd8] sm:$0xff]
    %v1190 = vld [vmem:[#allocation2 + $0xe0] sm:$0xff]
    %v1191 = vld [vmem:[#allocation2 + $0xe8] sm:$0xff]
    %v1192 = vld [vmem:[#allocation2 + $0xf0] sm:$0xff]
    %v1193 = vld [vmem:[#allocation2 + $0xf8] sm:$0xff]
    %v1194 = vld [vmem:[#allocation2 + $0x100] sm:$0xff]
    %v1195 = vld [vmem:[#allocation2 + $0x108] sm:$0xff]
    %v1196 = vld [vmem:[#allocation2 + $0x110] sm:$0xff]
    %v1197 = vld [vmem:[#allocation2 + $0x118] sm:$0xff]
    %v1198 = vld [vmem:[#allocation2 + $0x120] sm:$0xff]
    %v1199 = vld [vmem:[#allocation2 + $0x128] sm:$0xff]
    %v1200 = vld [vmem:[#allocation2 + $0x130] sm:$0xff]
    %v1201 = vld [vmem:[#allocation2 + $0x138] sm:$0xff]
    %v1202 = vld [vmem:[#allocation2 + $0x140] sm:$0xff]
    %v1203 = vld [vmem:[#allocation2 + $0x148] sm:$0xff]
    %v1204 = vld [vmem:[#allocation2 + $0x150] sm:$0xff]
    %v1205 = vld [vmem:[#allocation2 + $0x158] sm:$0xff]
    %v1206 = vld [vmem:[#allocation2 + $0x160] sm:$0xff]
    %v1207 = vld [vmem:[#allocation2 + $0x168] sm:$0xff]
    %v1208 = vld [vmem:[#allocation2 + $0x170] sm:$0xff]
    %v1209 = vld [vmem:[#allocation2 + $0x178] sm:$0xff]
    %v1210 = vld [vmem:[#allocation2 + $0x180] sm:$0xff]
    %v1211 = vld [vmem:[#allocation2 + $0x188] sm:$0xff]
    %v1212 = vld [vmem:[#allocation2 + $0x190] sm:$0xff]
    %v1213 = vld [vmem:[#allocation2 + $0x198] sm:$0xff]
    %v1214 = vld [vmem:[#allocation2 + $0x1a0] sm:$0xff]
    %v1215 = vld [vmem:[#allocation2 + $0x1a8] sm:$0xff]
    %v1216 = vld [vmem:[#allocation2 + $0x1b0] sm:$0xff]
    %v1217 = vld [vmem:[#allocation2 + $0x1b8] sm:$0xff]
    %v1218 = vld [vmem:[#allocation2 + $0x1c0] sm:$0xff]
    %v1219 = vld [vmem:[#allocation2 + $0x1c8] sm:$0xff]
    %v1220 = vld [vmem:[#allocation2 + $0x1d0] sm:$0xff]
    %v1221 = vld [vmem:[#allocation2 + $0x1d8] sm:$0xff]
    %v1222 = vld [vmem:[#allocation2 + $0x1e0] sm:$0xff]
    %v1223 = vld [vmem:[#allocation2 + $0x1e8] sm:$0xff]
    %v1224 = vld [vmem:[#allocation2 + $0x1f0] sm:$0xff]
    %v1226 = vsel %vm531, %v930, 0
    %1228 = vmatprep.subr.mxu0 0.0
    %1229 = vmatpush1.msra.mxu0 0.0
    %1230 = vmatprep.subr.mxu0 0.0
    %1231 = vmatpush1.msra.mxu0 0.0
    %1232 = vmatprep.subr.mxu0 0.0
    %1233 = vmatpush1.msra.mxu0 0.0
    %1234 = vmatprep.subr.mxu0 0.0
    %1235 = vmatpush1.msra.mxu0 0.0
    %1236 = vmatprep.subr.mxu0 0.0
    %1237 = vmatpush1.msra.mxu0 0.0
    %1238 = vmatprep.subr.mxu0 0.0
    %1239 = vmatpush1.msra.mxu0 0.0
    %1240 = vmatprep.subr.mxu0 0.0
    %1241 = vmatpush1.msra.mxu0 0.0
    %1242 = vmatprep.subr.mxu0 %v1219
    %1243 = vmatpush1.msra.mxu0 %v1218
    %1244 = vmatprep.subr.mxu0 %v1212
    %1245 = vmatpush1.msra.mxu0 %v1211
    %1246 = vmatprep.subr.mxu0 %v1205
    %1247 = vmatpush1.msra.mxu0 %v1204
    %1248 = vmatprep.subr.mxu0 %v1198
    %1249 = vmatpush1.msra.mxu0 %v1197
    %1250 = vmatprep.subr.mxu0 %v1191
    %1251 = vmatpush1.msra.mxu0 %v1190
    %1252 = vmatprep.subr.mxu0 %v1184
    %1253 = vmatpush1.msra.mxu0 %v1183
    %1254 = vmatprep.subr.mxu0 %v1177
    %1255 = vmatpush1.msra.mxu0 %v1176
    %1256 = vmatprep.subr.mxu0 %v1170
    %1257 = vmatpush1.msra.mxu0 %v1169
    %1258 = vmatprep.subr.mxu0 %v1163
    %1259 = vmatpush1.msra.mxu0 %v1162
    %1260 = vmatprep.subr.mxu0 0.0
    %1261 = vmatpush2.msra.mxu0 0.0
    %1262 = vmatprep.subr.mxu0 0.0
    %1263 = vmatpush2.msra.mxu0 0.0
    %1264 = vmatprep.subr.mxu0 0.0
    %1265 = vmatpush2.msra.mxu0 0.0
    %1266 = vmatprep.subr.mxu0 0.0
    %1267 = vmatpush2.msra.mxu0 0.0
    %1268 = vmatprep.subr.mxu0 0.0
    %1269 = vmatpush2.msra.mxu0 0.0
    %1270 = vmatprep.subr.mxu0 0.0
    %1271 = vmatpush2.msra.mxu0 0.0
    %1272 = vmatprep.subr.mxu0 0.0
    %1273 = vmatpush2.msra.mxu0 0.0
    %1274 = vmatprep.subr.mxu0 0.0
    %1275 = vmatpush2.msra.mxu0 0.0
    %1276 = vmatprep.subr.mxu0 0.0
    %1277 = vmatpush2.msra.mxu0 0.0
    %1278 = vmatprep.subr.mxu0 0.0
    %1279 = vmatpush2.msra.mxu0 0.0
    %1280 = vmatprep.subr.mxu0 0.0
    %1281 = vmatpush2.msra.mxu0 0.0
    %1282 = vmatprep.subr.mxu0 0.0
    %1283 = vmatpush2.msra.mxu0 0.0
    %1284 = vmatprep.subr.mxu0 0.0
    %1285 = vmatpush2.msra.mxu0 0.0
    %1286 = vmatprep.subr.mxu0 0.0
    %1287 = vmatpush2.msra.mxu0 0.0
    %1288 = vmatprep.subr.mxu0 0.0
    %1289 = vmatpush2.msra.mxu0 0.0
    %1290 = vmatprep.subr.mxu0 0.0
    %1291 = vmatpush2.msra.mxu0 0.0
    %1292 = vmatprep.mubr.f32.mxu0 0.0
    %1293 = vmatmul.mubr.f32.gmra.mxu0 %v1226
    %v1294 = vpop.f32.mrf.mxu0
    %v1295 = vadd.f32 0.0, %v1294
    %v1296 = vpop.f32.mrf.mxu0
    %v1297 = vadd.f32 0.0, %v1296
    %1298 = vdwg.mxu0
    %1299 = vmatprep.subr.mxu0 0.0
    %1300 = vmatpush1.msra.mxu0 0.0
    %1301 = vmatprep.subr.mxu0 0.0
    %1302 = vmatpush1.msra.mxu0 0.0
    %1303 = vmatprep.subr.mxu0 0.0
    %1304 = vmatpush1.msra.mxu0 0.0
    %1305 = vmatprep.subr.mxu0 0.0
    %1306 = vmatpush1.msra.mxu0 0.0
    %1307 = vmatprep.subr.mxu0 0.0
    %1308 = vmatpush1.msra.mxu0 0.0
    %1309 = vmatprep.subr.mxu0 0.0
    %1310 = vmatpush1.msra.mxu0 0.0
    %1311 = vmatprep.subr.mxu0 0.0
    %1312 = vmatpush1.msra.mxu0 0.0
    %1313 = vmatprep.subr.mxu0 %v1221
    %1314 = vmatpush1.msra.mxu0 %v1220
    %1315 = vmatprep.subr.mxu0 %v1214
    %1316 = vmatpush1.msra.mxu0 %v1213
    %1317 = vmatprep.subr.mxu0 %v1207
    %1318 = vmatpush1.msra.mxu0 %v1206
    %1319 = vmatprep.subr.mxu0 %v1200
    %1320 = vmatpush1.msra.mxu0 %v1199
    %1321 = vmatprep.subr.mxu0 %v1193
    %1322 = vmatpush1.msra.mxu0 %v1192
    %1323 = vmatprep.subr.mxu0 %v1186
    %1324 = vmatpush1.msra.mxu0 %v1185
    %1325 = vmatprep.subr.mxu0 %v1179
    %1326 = vmatpush1.msra.mxu0 %v1178
    %1327 = vmatprep.subr.mxu0 %v1172
    %1328 = vmatpush1.msra.mxu0 %v1171
    %1329 = vmatprep.subr.mxu0 %v1165
    %1330 = vmatpush1.msra.mxu0 %v1164
    %1331 = vmatprep.subr.mxu0 0.0
    %1332 = vmatpush2.msra.mxu0 0.0
    %1333 = vmatprep.subr.mxu0 0.0
    %1334 = vmatpush2.msra.mxu0 0.0
    %1335 = vmatprep.subr.mxu0 0.0
    %1336 = vmatpush2.msra.mxu0 0.0
    %1337 = vmatprep.subr.mxu0 0.0
    %1338 = vmatpush2.msra.mxu0 0.0
    %1339 = vmatprep.subr.mxu0 0.0
    %1340 = vmatpush2.msra.mxu0 0.0
    %1341 = vmatprep.subr.mxu0 0.0
    %1342 = vmatpush2.msra.mxu0 0.0
    %1343 = vmatprep.subr.mxu0 0.0
    %1344 = vmatpush2.msra.mxu0 0.0
    %1345 = vmatprep.subr.mxu0 0.0
    %1346 = vmatpush2.msra.mxu0 0.0
    %1347 = vmatprep.subr.mxu0 0.0
    %1348 = vmatpush2.msra.mxu0 0.0
    %1349 = vmatprep.subr.mxu0 0.0
    %1350 = vmatpush2.msra.mxu0 0.0
    %1351 = vmatprep.subr.mxu0 0.0
    %1352 = vmatpush2.msra.mxu0 0.0
    %1353 = vmatprep.subr.mxu0 0.0
    %1354 = vmatpush2.msra.mxu0 0.0
    %1355 = vmatprep.subr.mxu0 0.0
    %1356 = vmatpush2.msra.mxu0 0.0
    %1357 = vmatprep.subr.mxu0 0.0
    %1358 = vmatpush2.msra.mxu0 0.0
    %1359 = vmatprep.subr.mxu0 0.0
    %1360 = vmatpush2.msra.mxu0 0.0
    %1361 = vmatprep.subr.mxu0 0.0
    %1362 = vmatpush2.msra.mxu0 0.0
    %1363 = vmatprep.mubr.f32.mxu0 0.0
    %1364 = vmatmul.mubr.f32.gmra.mxu0 %v1226
    %v1365 = vpop.f32.mrf.mxu0
    %v1366 = vadd.f32 0.0, %v1365
    %v1367 = vpop.f32.mrf.mxu0
    %v1368 = vadd.f32 0.0, %v1367
    %1369 = vdwg.mxu0
    %1370 = vmatprep.subr.mxu0 0.0
    %1371 = vmatpush1.msra.mxu0 0.0
    %1372 = vmatprep.subr.mxu0 0.0
    %1373 = vmatpush1.msra.mxu0 0.0
    %1374 = vmatprep.subr.mxu0 0.0
    %1375 = vmatpush1.msra.mxu0 0.0
    %1376 = vmatprep.subr.mxu0 0.0
    %1377 = vmatpush1.msra.mxu0 0.0
    %1378 = vmatprep.subr.mxu0 0.0
    %1379 = vmatpush1.msra.mxu0 0.0
    %1380 = vmatprep.subr.mxu0 0.0
    %1381 = vmatpush1.msra.mxu0 0.0
    %1382 = vmatprep.subr.mxu0 0.0
    %1383 = vmatpush1.msra.mxu0 0.0
    %1384 = vmatprep.subr.mxu0 %v1223
    %1385 = vmatpush1.msra.mxu0 %v1222
    %1386 = vmatprep.subr.mxu0 %v1216
    %1387 = vmatpush1.msra.mxu0 %v1215
    %1388 = vmatprep.subr.mxu0 %v1209
    %1389 = vmatpush1.msra.mxu0 %v1208
    %1390 = vmatprep.subr.mxu0 %v1202
    %1391 = vmatpush1.msra.mxu0 %v1201
    %1392 = vmatprep.subr.mxu0 %v1195
    %1393 = vmatpush1.msra.mxu0 %v1194
    %1394 = vmatprep.subr.mxu0 %v1188
    %1395 = vmatpush1.msra.mxu0 %v1187
    %1396 = vmatprep.subr.mxu0 %v1181
    %1397 = vmatpush1.msra.mxu0 %v1180
    %1398 = vmatprep.subr.mxu0 %v1174
    %1399 = vmatpush1.msra.mxu0 %v1173
    %1400 = vmatprep.subr.mxu0 %v1167
    %1401 = vmatpush1.msra.mxu0 %v1166
    %1402 = vmatprep.subr.mxu0 0.0
    %1403 = vmatpush2.msra.mxu0 0.0
    %1404 = vmatprep.subr.mxu0 0.0
    %1405 = vmatpush2.msra.mxu0 0.0
    %1406 = vmatprep.subr.mxu0 0.0
    %1407 = vmatpush2.msra.mxu0 0.0
    %1408 = vmatprep.subr.mxu0 0.0
    %1409 = vmatpush2.msra.mxu0 0.0
    %1410 = vmatprep.subr.mxu0 0.0
    %1411 = vmatpush2.msra.mxu0 0.0
    %1412 = vmatprep.subr.mxu0 0.0
    %1413 = vmatpush2.msra.mxu0 0.0
    %1414 = vmatprep.subr.mxu0 0.0
    %1415 = vmatpush2.msra.mxu0 0.0
    %1416 = vmatprep.subr.mxu0 0.0
    %1417 = vmatpush2.msra.mxu0 0.0
    %1418 = vmatprep.subr.mxu0 0.0
    %1419 = vmatpush2.msra.mxu0 0.0
    %1420 = vmatprep.subr.mxu0 0.0
    %1421 = vmatpush2.msra.mxu0 0.0
    %1422 = vmatprep.subr.mxu0 0.0
    %1423 = vmatpush2.msra.mxu0 0.0
    %1424 = vmatprep.subr.mxu0 0.0
    %1425 = vmatpush2.msra.mxu0 0.0
    %1426 = vmatprep.subr.mxu0 0.0
    %1427 = vmatpush2.msra.mxu0 0.0
    %1428 = vmatprep.subr.mxu0 0.0
    %1429 = vmatpush2.msra.mxu0 0.0
    %1430 = vmatprep.subr.mxu0 0.0
    %1431 = vmatpush2.msra.mxu0 0.0
    %1432 = vmatprep.subr.mxu0 0.0
    %1433 = vmatpush2.msra.mxu0 0.0
    %1434 = vmatprep.mubr.f32.mxu0 0.0
    %1435 = vmatmul.mubr.f32.gmra.mxu0 %v1226
    %v1436 = vpop.f32.mrf.mxu0
    %v1437 = vadd.f32 0.0, %v1436
    %v1438 = vpop.f32.mrf.mxu0
    %v1439 = vadd.f32 0.0, %v1438
    %1440 = vdwg.mxu0
    %1441 = vmatprep.subr.mxu0 0.0
    %1442 = vmatpush1.msra.mxu0 0.0
    %1443 = vmatprep.subr.mxu0 0.0
    %1444 = vmatpush1.msra.mxu0 0.0
    %1445 = vmatprep.subr.mxu0 0.0
    %1446 = vmatpush1.msra.mxu0 0.0
    %1447 = vmatprep.subr.mxu0 0.0
    %1448 = vmatpush1.msra.mxu0 0.0
    %1449 = vmatprep.subr.mxu0 0.0
    %1450 = vmatpush1.msra.mxu0 0.0
    %1451 = vmatprep.subr.mxu0 0.0
    %1452 = vmatpush1.msra.mxu0 0.0
    %1453 = vmatprep.subr.mxu0 0.0
    %1454 = vmatpush1.msra.mxu0 0.0
    %1455 = vmatprep.subr.mxu0 0.0
    %1456 = vmatpush1.msra.mxu0 %v1224
    %1457 = vmatprep.subr.mxu0 0.0
    %1458 = vmatpush1.msra.mxu0 %v1217
    %1459 = vmatprep.subr.mxu0 0.0
    %1460 = vmatpush1.msra.mxu0 %v1210
    %1461 = vmatprep.subr.mxu0 0.0
    %1462 = vmatpush1.msra.mxu0 %v1203
    %1463 = vmatprep.subr.mxu0 0.0
    %1464 = vmatpush1.msra.mxu0 %v1196
    %1465 = vmatprep.subr.mxu0 0.0
    %1466 = vmatpush1.msra.mxu0 %v1189
    %1467 = vmatprep.subr.mxu0 0.0
    %1468 = vmatpush1.msra.mxu0 %v1182
    %1469 = vmatprep.subr.mxu0 0.0
    %1470 = vmatpush1.msra.mxu0 %v1175
    %1471 = vmatprep.subr.mxu0 0.0
    %1472 = vmatpush1.msra.mxu0 %v1168
    %1473 = vmatprep.subr.mxu0 0.0
    %1474 = vmatpush2.msra.mxu0 0.0
    %1475 = vmatprep.subr.mxu0 0.0
    %1476 = vmatpush2.msra.mxu0 0.0
    %1477 = vmatprep.subr.mxu0 0.0
    %1478 = vmatpush2.msra.mxu0 0.0
    %1479 = vmatprep.subr.mxu0 0.0
    %1480 = vmatpush2.msra.mxu0 0.0
    %1481 = vmatprep.subr.mxu0 0.0
    %1482 = vmatpush2.msra.mxu0 0.0
    %1483 = vmatprep.subr.mxu0 0.0
    %1484 = vmatpush2.msra.mxu0 0.0
    %1485 = vmatprep.subr.mxu0 0.0
    %1486 = vmatpush2.msra.mxu0 0.0
    %1487 = vmatprep.subr.mxu0 0.0
    %1488 = vmatpush2.msra.mxu0 0.0
    %1489 = vmatprep.subr.mxu0 0.0
    %1490 = vmatpush2.msra.mxu0 0.0
    %1491 = vmatprep.subr.mxu0 0.0
    %1492 = vmatpush2.msra.mxu0 0.0
    %1493 = vmatprep.subr.mxu0 0.0
    %1494 = vmatpush2.msra.mxu0 0.0
    %1495 = vmatprep.subr.mxu0 0.0
    %1496 = vmatpush2.msra.mxu0 0.0
    %1497 = vmatprep.subr.mxu0 0.0
    %1498 = vmatpush2.msra.mxu0 0.0
    %1499 = vmatprep.subr.mxu0 0.0
    %1500 = vmatpush2.msra.mxu0 0.0
    %1501 = vmatprep.subr.mxu0 0.0
    %1502 = vmatpush2.msra.mxu0 0.0
    %1503 = vmatprep.subr.mxu0 0.0
    %1504 = vmatpush2.msra.mxu0 0.0
    %1505 = vmatprep.mubr.f32.mxu0 0.0
    %1506 = vmatmul.mubr.f32.gmra.mxu0 %v1226
    %v1507 = vpop.f32.mrf.mxu0
    %v1508 = vadd.f32 0.0, %v1507
    %v1509 = vpop.f32.mrf.mxu0
    %1510 = vdwg.mxu0
    %v1511 = vsel %vm214, 1, 0
    %v1512 = vsel %vm215, 1, 0
    %v1513 = vsel %vm216, 1, 0
    %v1514 = vsel %vm217, 1, 0
    %v1515 = vsel %vm218, 1, 0
    %v1516 = vsel %vm219, 1, 0
    %v1517 = vsel %vm220, 1, 0
    %v1518 = vcvt.s32.f32 %v1511
    %v1519 = vcvt.s32.f32 %v1512
    %v1520 = vcvt.s32.f32 %v1513
    %v1521 = vcvt.s32.f32 %v1514
    %v1522 = vcvt.s32.f32 %v1515
    %v1523 = vcvt.s32.f32 %v1516
    %v1524 = vcvt.s32.f32 %v1517
    %v1525 = vmul.f32 %v1295, %v1518
    %v1526 = vmul.f32 %v1297, %v1519
    %v1527 = vmul.f32 %v1366, %v1520
    %v1528 = vmul.f32 %v1368, %v1521
    %v1529 = vmul.f32 %v1437, %v1522
    %v1530 = vmul.f32 %v1439, %v1523
    %v1531 = vmul.f32 %v1508, %v1524
    %v1532 = vadd.f32 %v1525, %v1526
    %v1533 = vadd.f32 %v1532, %v1527
    %v1534 = vadd.f32 %v1533, %v1528
    %v1535 = vadd.f32 %v1534, %v1529
    %v1536 = vadd.f32 %v1535, %v1530
    %v1537 = vadd.f32 %v1536, %v1531
    %1538 = vadd.xlane.f32.xlu0 %v1537
    %v1539 = vpop.xlane.xlu0 %1538
    %v1540 = vmul.f32 %v1525, %v1295
    %v1541 = vmul.f32 %v1526, %v1297
    %v1542 = vmul.f32 %v1527, %v1366
    %v1543 = vmul.f32 %v1528, %v1368
    %v1544 = vmul.f32 %v1529, %v1437
    %v1545 = vmul.f32 %v1530, %v1439
    %v1546 = vmul.f32 %v1531, %v1508
    %v1547 = vadd.f32 %v1540, %v1541
    %v1548 = vadd.f32 %v1547, %v1542
    %v1549 = vadd.f32 %v1548, %v1543
    %v1550 = vadd.f32 %v1549, %v1544
    %v1551 = vadd.f32 %v1550, %v1545
    %v1552 = vadd.f32 %v1551, %v1546
    %1553 = vadd.xlane.f32.xlu0 %v1552
    %v1554 = vpop.xlane.xlu0 %1553
    %v1555 = vmul.f32 %v1539, 0.001953125
    %v1556 = vmul.f32 %v1554, 0.001953125
    %v1557 = vmul.f32 %v1555, %v1555
    %v1558 = vsub.f32 %v1556, %v1557
    %v1559 = vmax.f32 %v1558, 0.0
    %v1560 = vsub.f32 %v1295, %v1555
    %v1561 = vsub.f32 %v1297, %v1555
    %v1562 = vsub.f32 %v1366, %v1555
    %v1563 = vsub.f32 %v1368, %v1555
    %v1564 = vsub.f32 %v1437, %v1555
    %v1565 = vsub.f32 %v1439, %v1555
    %v1566 = vsub.f32 %v1508, %v1555
    %v1567 = vadd.f32 %v1559, 1e-05
    %v1568 = vrsqrt.pop %v1567
    %v1569 = vmul.f32 %v1560, %v1568
    %v1570 = vmul.f32 %v1561, %v1568
    %v1571 = vmul.f32 %v1562, %v1568
    %v1572 = vmul.f32 %v1563, %v1568
    %v1573 = vmul.f32 %v1564, %v1568
    %v1574 = vmul.f32 %v1565, %v1568
    %v1575 = vmul.f32 %v1566, %v1568
    %v1576 = vld [vmem:[%s5] sm:$0xff]
    %1578 = vset.pattern.permute.xlu0 0
    %1579 = vperm.xlu0 %1578, %v1576
    %v1580 = vpop.permute.xlu0 %1579
    %v1582 = vmul.f32 %v1569, %v1580
    %v1583 = vmul.f32 %v1570, %v1580
    %v1584 = vmul.f32 %v1571, %v1580
    %v1585 = vmul.f32 %v1572, %v1580
    %v1586 = vmul.f32 %v1573, %v1580
    %v1587 = vmul.f32 %v1574, %v1580
    %v1588 = vmul.f32 %v1575, %v1580
    %v1589 = vld [vmem:[%s6] sm:$0xff]
    %1591 = vset.pattern.permute.xlu0 0
    %1592 = vperm.xlu0 %1591, %v1589
    %v1593 = vpop.permute.xlu0 %1592
    %v1595 = vadd.f32 %v1582, %v1593
    %v1596 = vadd.f32 %v1583, %v1593
    %v1597 = vadd.f32 %v1584, %v1593
    %v1598 = vadd.f32 %v1585, %v1593
    %v1599 = vadd.f32 %v1586, %v1593
    %v1600 = vadd.f32 %v1587, %v1593
    %v1601 = vadd.f32 %v1588, %v1593
    %v1602 = vld [vmem:[%s7] sm:$0xff]
    %v1603 = vld [vmem:[%s8] sm:$0xff]
    %1605 = vset.pattern.permute.xlu0 0
    %1606 = vperm.xlu0 %1605, %v1603
    %v1607 = vpop.permute.xlu0 %1606
    %vm1609 = vcmask 64512
    %v1611 = vsel %vm1609, %v1602, 0
    %1613 = vmatprep.subr.mxu0 0.0
    %1614 = vmatpush1.msra.mxu0 0.0
    %1615 = vmatprep.subr.mxu0 0.0
    %1616 = vmatpush1.msra.mxu0 0.0
    %1617 = vmatprep.subr.mxu0 0.0
    %1618 = vmatpush1.msra.mxu0 0.0
    %1619 = vmatprep.subr.mxu0 0.0
    %1620 = vmatpush1.msra.mxu0 0.0
    %1621 = vmatprep.subr.mxu0 0.0
    %1622 = vmatpush1.msra.mxu0 0.0
    %1623 = vmatprep.subr.mxu0 0.0
    %1624 = vmatpush1.msra.mxu0 0.0
    %1625 = vmatprep.subr.mxu0 0.0
    %1626 = vmatpush1.msra.mxu0 0.0
    %1627 = vmatprep.subr.mxu0 0.0
    %1628 = vmatpush1.msra.mxu0 0.0
    %1629 = vmatprep.subr.mxu0 0.0
    %1630 = vmatpush1.msra.mxu0 0.0
    %1631 = vmatprep.subr.mxu0 0.0
    %1632 = vmatpush1.msra.mxu0 0.0
    %1633 = vmatprep.subr.mxu0 0.0
    %1634 = vmatpush1.msra.mxu0 0.0
    %1635 = vmatprep.subr.mxu0 0.0
    %1636 = vmatpush1.msra.mxu0 0.0
    %1637 = vmatprep.subr.mxu0 0.0
    %1638 = vmatpush1.msra.mxu0 0.0
    %1639 = vmatprep.subr.mxu0 0.0
    %1640 = vmatpush1.msra.mxu0 0.0
    %1641 = vmatprep.subr.mxu0 0.0
    %1642 = vmatpush1.msra.mxu0 0.0
    %1643 = vmatprep.subr.mxu0 %v458
    %1644 = vmatpush1.msra.mxu0 %v459
    %1645 = vmatprep.subr.mxu0 0.0
    %1646 = vmatpush2.msra.mxu0 0.0
    %1647 = vmatprep.subr.mxu0 0.0
    %1648 = vmatpush2.msra.mxu0 0.0
    %1649 = vmatprep.subr.mxu0 0.0
    %1650 = vmatpush2.msra.mxu0 0.0
    %1651 = vmatprep.subr.mxu0 0.0
    %1652 = vmatpush2.msra.mxu0 0.0
    %1653 = vmatprep.subr.mxu0 0.0
    %1654 = vmatpush2.msra.mxu0 0.0
    %1655 = vmatprep.subr.mxu0 0.0
    %1656 = vmatpush2.msra.mxu0 0.0
    %1657 = vmatprep.subr.mxu0 0.0
    %1658 = vmatpush2.msra.mxu0 0.0
    %1659 = vmatprep.subr.mxu0 0.0
    %1660 = vmatpush2.msra.mxu0 0.0
    %1661 = vmatprep.subr.mxu0 0.0
    %1662 = vmatpush2.msra.mxu0 0.0
    %1663 = vmatprep.subr.mxu0 0.0
    %1664 = vmatpush2.msra.mxu0 0.0
    %1665 = vmatprep.subr.mxu0 0.0
    %1666 = vmatpush2.msra.mxu0 0.0
    %1667 = vmatprep.subr.mxu0 0.0
    %1668 = vmatpush2.msra.mxu0 0.0
    %1669 = vmatprep.subr.mxu0 0.0
    %1670 = vmatpush2.msra.mxu0 0.0
    %1671 = vmatprep.subr.mxu0 0.0
    %1672 = vmatpush2.msra.mxu0 0.0
    %1673 = vmatprep.subr.mxu0 0.0
    %1674 = vmatpush2.msra.mxu0 0.0
    %1675 = vmatprep.subr.mxu0 0.0
    %1676 = vmatpush2.msra.mxu0 0.0
    %1677 = vmatprep.mubr.f32.mxu0 0.0
    %1678 = vmatmul.mubr.f32.gmra.mxu0 %v1611
    %v1679 = vpop.f32.mrf.mxu0
    %v1680 = vadd.f32 %v1607, %v1679
    %v1681 = vpop.f32.mrf.mxu0
    %v1682 = vadd.f32 %v1607, %v1681
    %1683 = vdwg.mxu0
    %1684 = vmatprep.subr.mxu0 0.0
    %1685 = vmatpush1.msra.mxu0 0.0
    %1686 = vmatprep.subr.mxu0 0.0
    %1687 = vmatpush1.msra.mxu0 0.0
    %1688 = vmatprep.subr.mxu0 0.0
    %1689 = vmatpush1.msra.mxu0 0.0
    %1690 = vmatprep.subr.mxu0 0.0
    %1691 = vmatpush1.msra.mxu0 0.0
    %1692 = vmatprep.subr.mxu0 0.0
    %1693 = vmatpush1.msra.mxu0 0.0
    %1694 = vmatprep.subr.mxu0 0.0
    %1695 = vmatpush1.msra.mxu0 0.0
    %1696 = vmatprep.subr.mxu0 0.0
    %1697 = vmatpush1.msra.mxu0 0.0
    %1698 = vmatprep.subr.mxu0 0.0
    %1699 = vmatpush1.msra.mxu0 0.0
    %1700 = vmatprep.subr.mxu0 0.0
    %1701 = vmatpush1.msra.mxu0 0.0
    %1702 = vmatprep.subr.mxu0 0.0
    %1703 = vmatpush1.msra.mxu0 0.0
    %1704 = vmatprep.subr.mxu0 0.0
    %1705 = vmatpush1.msra.mxu0 0.0
    %1706 = vmatprep.subr.mxu0 0.0
    %1707 = vmatpush1.msra.mxu0 0.0
    %1708 = vmatprep.subr.mxu0 0.0
    %1709 = vmatpush1.msra.mxu0 0.0
    %1710 = vmatprep.subr.mxu0 0.0
    %1711 = vmatpush1.msra.mxu0 0.0
    %1712 = vmatprep.subr.mxu0 0.0
    %1713 = vmatpush1.msra.mxu0 0.0
    %1714 = vmatprep.subr.mxu0 %v456
    %1715 = vmatpush1.msra.mxu0 %v457
    %1716 = vmatprep.subr.mxu0 0.0
    %1717 = vmatpush2.msra.mxu0 0.0
    %1718 = vmatprep.subr.mxu0 0.0
    %1719 = vmatpush2.msra.mxu0 0.0
    %1720 = vmatprep.subr.mxu0 0.0
    %1721 = vmatpush2.msra.mxu0 0.0
    %1722 = vmatprep.subr.mxu0 0.0
    %1723 = vmatpush2.msra.mxu0 0.0
    %1724 = vmatprep.subr.mxu0 0.0
    %1725 = vmatpush2.msra.mxu0 0.0
    %1726 = vmatprep.subr.mxu0 0.0
    %1727 = vmatpush2.msra.mxu0 0.0
    %1728 = vmatprep.subr.mxu0 0.0
    %1729 = vmatpush2.msra.mxu0 0.0
    %1730 = vmatprep.subr.mxu0 0.0
    %1731 = vmatpush2.msra.mxu0 0.0
    %1732 = vmatprep.subr.mxu0 0.0
    %1733 = vmatpush2.msra.mxu0 0.0
    %1734 = vmatprep.subr.mxu0 0.0
    %1735 = vmatpush2.msra.mxu0 0.0
    %1736 = vmatprep.subr.mxu0 0.0
    %1737 = vmatpush2.msra.mxu0 0.0
    %1738 = vmatprep.subr.mxu0 0.0
    %1739 = vmatpush2.msra.mxu0 0.0
    %1740 = vmatprep.subr.mxu0 0.0
    %1741 = vmatpush2.msra.mxu0 0.0
    %1742 = vmatprep.subr.mxu0 0.0
    %1743 = vmatpush2.msra.mxu0 0.0
    %1744 = vmatprep.subr.mxu0 0.0
    %1745 = vmatpush2.msra.mxu0 0.0
    %1746 = vmatprep.subr.mxu0 0.0
    %1747 = vmatpush2.msra.mxu0 0.0
    %1748 = vmatprep.mubr.f32.mxu0 0.0
    %1749 = vmatmul.mubr.f32.gmra.mxu0 %v1611
    %v1750 = vpop.f32.mrf.mxu0
    %v1751 = vadd.f32 %v1607, %v1750
    %v1752 = vpop.f32.mrf.mxu0
    %v1753 = vadd.f32 %v1607, %v1752
    %1754 = vdwg.mxu0
    %1755 = vmatprep.subr.mxu0 0.0
    %1756 = vmatpush1.msra.mxu0 0.0
    %1757 = vmatprep.subr.mxu0 0.0
    %1758 = vmatpush1.msra.mxu0 0.0
    %1759 = vmatprep.subr.mxu0 0.0
    %1760 = vmatpush1.msra.mxu0 0.0
    %1761 = vmatprep.subr.mxu0 0.0
    %1762 = vmatpush1.msra.mxu0 0.0
    %1763 = vmatprep.subr.mxu0 0.0
    %1764 = vmatpush1.msra.mxu0 0.0
    %1765 = vmatprep.subr.mxu0 0.0
    %1766 = vmatpush1.msra.mxu0 0.0
    %1767 = vmatprep.subr.mxu0 0.0
    %1768 = vmatpush1.msra.mxu0 0.0
    %1769 = vmatprep.subr.mxu0 0.0
    %1770 = vmatpush1.msra.mxu0 0.0
    %1771 = vmatprep.subr.mxu0 0.0
    %1772 = vmatpush1.msra.mxu0 0.0
    %1773 = vmatprep.subr.mxu0 0.0
    %1774 = vmatpush1.msra.mxu0 0.0
    %1775 = vmatprep.subr.mxu0 0.0
    %1776 = vmatpush1.msra.mxu0 0.0
    %1777 = vmatprep.subr.mxu0 0.0
    %1778 = vmatpush1.msra.mxu0 0.0
    %1779 = vmatprep.subr.mxu0 0.0
    %1780 = vmatpush1.msra.mxu0 0.0
    %1781 = vmatprep.subr.mxu0 0.0
    %1782 = vmatpush1.msra.mxu0 0.0
    %1783 = vmatprep.subr.mxu0 0.0
    %1784 = vmatpush1.msra.mxu0 0.0
    %1785 = vmatprep.subr.mxu0 %v454
    %1786 = vmatpush1.msra.mxu0 %v455
    %1787 = vmatprep.subr.mxu0 0.0
    %1788 = vmatpush2.msra.mxu0 0.0
    %1789 = vmatprep.subr.mxu0 0.0
    %1790 = vmatpush2.msra.mxu0 0.0
    %1791 = vmatprep.subr.mxu0 0.0
    %1792 = vmatpush2.msra.mxu0 0.0
    %1793 = vmatprep.subr.mxu0 0.0
    %1794 = vmatpush2.msra.mxu0 0.0
    %1795 = vmatprep.subr.mxu0 0.0
    %1796 = vmatpush2.msra.mxu0 0.0
    %1797 = vmatprep.subr.mxu0 0.0
    %1798 = vmatpush2.msra.mxu0 0.0
    %1799 = vmatprep.subr.mxu0 0.0
    %1800 = vmatpush2.msra.mxu0 0.0
    %1801 = vmatprep.subr.mxu0 0.0
    %1802 = vmatpush2.msra.mxu0 0.0
    %1803 = vmatprep.subr.mxu0 0.0
    %1804 = vmatpush2.msra.mxu0 0.0
    %1805 = vmatprep.subr.mxu0 0.0
    %1806 = vmatpush2.msra.mxu0 0.0
    %1807 = vmatprep.subr.mxu0 0.0
    %1808 = vmatpush2.msra.mxu0 0.0
    %1809 = vmatprep.subr.mxu0 0.0
    %1810 = vmatpush2.msra.mxu0 0.0
    %1811 = vmatprep.subr.mxu0 0.0
    %1812 = vmatpush2.msra.mxu0 0.0
    %1813 = vmatprep.subr.mxu0 0.0
    %1814 = vmatpush2.msra.mxu0 0.0
    %1815 = vmatprep.subr.mxu0 0.0
    %1816 = vmatpush2.msra.mxu0 0.0
    %1817 = vmatprep.subr.mxu0 0.0
    %1818 = vmatpush2.msra.mxu0 0.0
    %1819 = vmatprep.mubr.f32.mxu0 0.0
    %1820 = vmatmul.mubr.f32.gmra.mxu0 %v1611
    %v1821 = vpop.f32.mrf.mxu0
    %v1822 = vadd.f32 %v1607, %v1821
    %v1823 = vpop.f32.mrf.mxu0
    %v1824 = vadd.f32 %v1607, %v1823
    %1825 = vdwg.mxu0
    %1826 = vmatprep.subr.mxu0 0.0
    %1827 = vmatpush1.msra.mxu0 0.0
    %1828 = vmatprep.subr.mxu0 0.0
    %1829 = vmatpush1.msra.mxu0 0.0
    %1830 = vmatprep.subr.mxu0 0.0
    %1831 = vmatpush1.msra.mxu0 0.0
    %1832 = vmatprep.subr.mxu0 0.0
    %1833 = vmatpush1.msra.mxu0 0.0
    %1834 = vmatprep.subr.mxu0 0.0
    %1835 = vmatpush1.msra.mxu0 0.0
    %1836 = vmatprep.subr.mxu0 0.0
    %1837 = vmatpush1.msra.mxu0 0.0
    %1838 = vmatprep.subr.mxu0 0.0
    %1839 = vmatpush1.msra.mxu0 0.0
    %1840 = vmatprep.subr.mxu0 0.0
    %1841 = vmatpush1.msra.mxu0 0.0
    %1842 = vmatprep.subr.mxu0 0.0
    %1843 = vmatpush1.msra.mxu0 0.0
    %1844 = vmatprep.subr.mxu0 0.0
    %1845 = vmatpush1.msra.mxu0 0.0
    %1846 = vmatprep.subr.mxu0 0.0
    %1847 = vmatpush1.msra.mxu0 0.0
    %1848 = vmatprep.subr.mxu0 0.0
    %1849 = vmatpush1.msra.mxu0 0.0
    %1850 = vmatprep.subr.mxu0 0.0
    %1851 = vmatpush1.msra.mxu0 0.0
    %1852 = vmatprep.subr.mxu0 0.0
    %1853 = vmatpush1.msra.mxu0 0.0
    %1854 = vmatprep.subr.mxu0 0.0
    %1855 = vmatpush1.msra.mxu0 0.0
    %1856 = vmatprep.subr.mxu0 0.0
    %1857 = vmatpush1.msra.mxu0 %v460
    %1858 = vmatprep.subr.mxu0 0.0
    %1859 = vmatpush2.msra.mxu0 0.0
    %1860 = vmatprep.subr.mxu0 0.0
    %1861 = vmatpush2.msra.mxu0 0.0
    %1862 = vmatprep.subr.mxu0 0.0
    %1863 = vmatpush2.msra.mxu0 0.0
    %1864 = vmatprep.subr.mxu0 0.0
    %1865 = vmatpush2.msra.mxu0 0.0
    %1866 = vmatprep.subr.mxu0 0.0
    %1867 = vmatpush2.msra.mxu0 0.0
    %1868 = vmatprep.subr.mxu0 0.0
    %1869 = vmatpush2.msra.mxu0 0.0
    %1870 = vmatprep.subr.mxu0 0.0
    %1871 = vmatpush2.msra.mxu0 0.0
    %1872 = vmatprep.subr.mxu0 0.0
    %1873 = vmatpush2.msra.mxu0 0.0
    %1874 = vmatprep.subr.mxu0 0.0
    %1875 = vmatpush2.msra.mxu0 0.0
    %1876 = vmatprep.subr.mxu0 0.0
    %1877 = vmatpush2.msra.mxu0 0.0
    %1878 = vmatprep.subr.mxu0 0.0
    %1879 = vmatpush2.msra.mxu0 0.0
    %1880 = vmatprep.subr.mxu0 0.0
    %1881 = vmatpush2.msra.mxu0 0.0
    %1882 = vmatprep.subr.mxu0 0.0
    %1883 = vmatpush2.msra.mxu0 0.0
    %1884 = vmatprep.subr.mxu0 0.0
    %1885 = vmatpush2.msra.mxu0 0.0
    %1886 = vmatprep.subr.mxu0 0.0
    %1887 = vmatpush2.msra.mxu0 0.0
    %1888 = vmatprep.subr.mxu0 0.0
    %1889 = vmatpush2.msra.mxu0 0.0
    %1890 = vmatprep.mubr.f32.mxu0 0.0
    %1891 = vmatmul.mubr.f32.gmra.mxu0 %v1611
    %v1892 = vpop.f32.mrf.mxu0
    %v1893 = vadd.f32 %v1607, %v1892
    %v1894 = vpop.f32.mrf.mxu0
    %1895 = vdwg.mxu0
    %v1896 = vadd.f32 %v1595, %v1680
    %v1897 = vadd.f32 %v1596, %v1682
    %v1898 = vadd.f32 %v1597, %v1751
    %v1899 = vadd.f32 %v1598, %v1753
    %v1900 = vadd.f32 %v1599, %v1822
    %v1901 = vadd.f32 %v1600, %v1824
    %v1902 = vadd.f32 %v1601, %v1893
    %v1903 = vmax.f32 %v1896, 0.0
    %v1904 = vmax.f32 %v1897, 0.0
    %v1905 = vmax.f32 %v1898, 0.0
    %v1906 = vmax.f32 %v1899, 0.0
    %v1907 = vmax.f32 %v1900, 0.0
    %v1908 = vmax.f32 %v1901, 0.0
    %v1909 = vmax.f32 %v1902, 0.0
    %1910 = vst [vmem:[#allocation6] sm:$0xff] %v1903
    %1911 = vst [vmem:[#allocation6 + $0x8] sm:$0xff] %v1904
    %1912 = vst [vmem:[#allocation6 + $0x10] sm:$0xff] %v1905
    %1913 = vst [vmem:[#allocation6 + $0x18] sm:$0xff] %v1906
    %1914 = vst [vmem:[#allocation6 + $0x20] sm:$0xff] %v1907
    %1915 = vst [vmem:[#allocation6 + $0x28] sm:$0xff] %v1908
    %1916 = vst [vmem:[#allocation6 + $0x30] sm:$0xff] %v1909
    // Predicated region
    $region42: #{tpu_custom_call.1} parent=1 // pred_check
      _
    $region43: #{tpu_custom_call.1} parent=1 // pred_check_branch
      %1918 = sbr.rel (0) target = $region45
    $region44: #{tpu_custom_call.1} parent=1 // pred_region
      %s1920 = ssub.s32 896, 896
      %1921 = vsyncadd [#allocation5], %s1920
      %s1923 = sshll.u32 [#allocation6], 4
      %s1924 = int_to_ptr.vmem [resolvable:$true] %s1923
      %1926 = dma.vmem_to_hbm [thread:$0]  %s1924, 896, %s9, [#allocation5]
    $region45: #{tpu_custom_call.1} parent=1 // pred_fallthru
      _
    // Predicated region
    $region46: #{tpu_custom_call.1} parent=1 // pred_check
      _
    $region47: #{tpu_custom_call.1} parent=1 // pred_check_branch
      %1928 = sbr.rel (0) target = $region49
    $region48: #{tpu_custom_call.1} parent=1 // pred_region
      %1929 = dma.done [#allocation5], 896
    $region49: #{tpu_custom_call.1} parent=1 // pred_fallthru
      _
    %1930 = vsyncpa [#allocation4], 1
    %1931 = vsyncpa [#allocation5], 1

</llo_original>
